<compile_context>
chip_gen: v7x
topology: tpu7x:2x2x1
jax: 0.10.0
libtpu: 0.0.40
codegen_flags: <defaults>
</compile_context>

<pallas_src>
import functools

import jax
import jax.numpy as jnp
from jax.experimental import pallas as pl
from jax.experimental.pallas import tpu as pltpu


# ----------------------------------------------------------------------------
# In-kernel WOS layer (channel-major: channels on sublanes, pixels on lanes)
# ----------------------------------------------------------------------------
def _wos_layer(x, w, t):
    """x: (Cin, TP) f32, w: (Cout, Cin) f32, t: (Cout, 1) f32 -> (Cout, TP)."""
    cin, tp = x.shape
    cout = w.shape[0]

    # Hoist broadcasts out of the candidate loop (no CSE for broadcast_in_dim).
    w_b = [jnp.broadcast_to(w[:, i:i + 1], (cout, tp)) for i in range(cin)]
    t_b = jnp.broadcast_to(t, (cout, tp))
    zero = jnp.zeros((cout, tp), dtype=jnp.float32)

    out = jnp.full((cout, tp), -jnp.inf, dtype=jnp.float32)
    # Cin is tiny (2 or 5): unroll candidate loop at trace time.
    for j in range(cin):
        xj = x[j:j + 1, :]                       # (1, TP) candidate values
        cmp = x >= xj                            # (Cin, TP) bool indicator
        mass = zero
        for i in range(cin):                     # weighted count >= candidate
            mass = mass + jnp.where(cmp[i:i + 1, :], w_b[i], 0.0)  # (Cout, TP)
        valid = mass >= t_b                      # (Cout, TP)
        out = jnp.where(valid, jnp.maximum(out, xj), out)
    return out


# ----------------------------------------------------------------------------
# Fused 3-layer kernel
# ----------------------------------------------------------------------------
def _net_kernel(x_ref, w1_ref, t1_ref, w2_ref, t2_ref, w3_ref, t3_ref, o_ref):
    x = x_ref[...].astype(jnp.float32)                     # (2, TP)
    h1 = _wos_layer(x, w1_ref[...], t1_ref[...])           # (5, TP)
    h2 = _wos_layer(h1, w2_ref[...], t2_ref[...])          # (5, TP)
    h3 = _wos_layer(h2, w3_ref[...], t3_ref[...])          # (1, TP)
    o_ref[...] = h3.astype(o_ref.dtype)


def _pick_tile_hw(hw, max_tile=8192):
    """Largest multiple of 128 that divides hw, capped at max_tile."""
    best = None
    t = 128
    while t <= min(hw, max_tile):
        if hw % t == 0:
            best = t
        t += 128
    return best


@jax.jit
def net_forward(x_nchw, params):
    """x_nchw: (N, 2, H, W) f32 -> (N, 1, H, W) f32."""
    w1, t1, w2, t2, w3, t3 = params
    n, c_in, h, w = x_nchw.shape
    hw = h * w
    tile_hw = _pick_tile_hw(hw)
    assert tile_hw is not None, "demo assumes H*W divisible by 128"

    # NCHW -> (N, C, HW): pure reshape, no transpose / HBM traffic.
    x3 = x_nchw.reshape(n, c_in, hw)

    grid = (n, hw // tile_hw)
    const = lambda i, j: (0, 0)  # noqa: E731  (weights/thresholds are not tiled)

    out3 = pl.pallas_call(
        _net_kernel,
        out_shape=jax.ShapeDtypeStruct((n, 1, hw), jnp.float32),
        grid_spec=pltpu.PrefetchScalarGridSpec(
            num_scalar_prefetch=0,
            grid=grid,
            in_specs=[
                # x tile: squeeze batch dim, channels on sublanes, pixels on lanes.
                pl.BlockSpec((None, c_in, tile_hw), lambda i, j: (i, 0, j)),
                pl.BlockSpec(w1.shape, const),
                pl.BlockSpec(t1.shape, const),
                pl.BlockSpec(w2.shape, const),
                pl.BlockSpec(t2.shape, const),
                pl.BlockSpec(w3.shape, const),
                pl.BlockSpec(t3.shape, const),
            ],
            # Lane-dense output store: (1, tile_hw).
            out_specs=pl.BlockSpec((None, 1, tile_hw), lambda i, j: (i, 0, j)),
        ),
        compiler_params=pltpu.CompilerParams(
            dimension_semantics=("parallel", "parallel")
        ),
    )(x3, w1, t1, w2, t2, w3, t3)

    # (N, 1, HW) -> NCHW
    return out3.reshape(n, 1, h, w)


# ----------------------------------------------------------------------------
# Pure-JAX reference (same semantics, different formulation) for verification
# ----------------------------------------------------------------------------
def _wos_ref(x, w, t):
    cmp = (x[:, :, None] >= x[:, None, :]).astype(jnp.float32)     # (P, i, j)
    mass = jnp.einsum("pij,oi->poj", cmp, w)                       # (P, o, j)
    valid = mass >= t.reshape(1, -1, 1)
    cand = jnp.where(valid, x[:, None, :], -jnp.inf)
    return cand.max(axis=-1)                                       # (P, o)


def net_reference(x_nchw, params):
    w1, t1, w2, t2, w3, t3 = params
    n, c_in, h, w = x_nchw.shape
    x_flat = jnp.transpose(x_nchw, (0, 2, 3, 1)).reshape(-1, c_in)
    h1 = _wos_ref(x_flat, w1, t1)
    h2 = _wos_ref(h1, w2, t2)
    h3 = _wos_ref(h2, w3, t3)
    return jnp.transpose(h3.reshape(n, h, w, 1), (0, 3, 1, 2))


# ----------------------------------------------------------------------------
# Deterministic parameter init (shapes implied by WOS(2,5,1), WOS(5,5,1), WOS(5,1,1))
# ----------------------------------------------------------------------------
def init_params(key):
    def one_layer(k, c_in, c_out):
        w = jax.random.uniform(k, (c_out, c_in), jnp.float32, 0.5, 1.5)
        t = 0.5 * jnp.sum(w, axis=1, keepdims=True)  # (c_out, 1): weighted median
        return w, t

    k1, k2, k3 = jax.random.split(key, 3)
    w1, t1 = one_layer(k1, 2, 5)
    w2, t2 = one_layer(k2, 5, 5)
    w3, t3 = one_layer(k3, 5, 1)
    return (w1, t1, w2, t2, w3, t3)


if __name__ == "__main__":
    key = jax.random.PRNGKey(0)
    k_params, k_x = jax.random.split(key)

    # Small NCHW input consistent with Net: (batch=2, channels=2, 16, 16)
    x = jax.random.normal(k_x, (2, 2, 16, 16), dtype=jnp.float32)
    params = init_params(k_params)

    y = net_forward(x, params)
    y = jax.block_until_ready(y)

    y_ref = net_reference(x, params)
    assert y.shape == (2, 1, 16, 16), y.shape
    assert jnp.allclose(y, y_ref, atol=1e-5, rtol=1e-5), "mismatch vs reference"

    print("KERNEL_OK")
</pallas_src>

<mosaic_0001>
module attributes {stable_mosaic.version = 11 : i64} {
  func.func @_net_kernel(%arg0: i32, %arg1: i32, %arg2: memref<1x2x256xf32, #tpu.memory_space<vmem>>, %arg3: memref<5x2xf32, #tpu.memory_space<vmem>>, %arg4: memref<5x1xf32, #tpu.memory_space<vmem>>, %arg5: memref<5x5xf32, #tpu.memory_space<vmem>>, %arg6: memref<5x1xf32, #tpu.memory_space<vmem>>, %arg7: memref<1x5xf32, #tpu.memory_space<vmem>>, %arg8: memref<1x1xf32, #tpu.memory_space<vmem>>, %arg9: memref<1x1x256xf32, #tpu.memory_space<vmem>>) attributes {dimension_semantics = [#tpu.dimension_semantics<parallel>, #tpu.dimension_semantics<parallel>], iteration_bounds = array<i64: 2, 1>, scalar_prefetch = 0 : i64, scratch_operands = 0 : i64, tpu.core_type = #tpu.core_type<tc>, window_params = [{transform_indices = @transform_0, window_bounds = array<i64: 1, 2, 256>}, {pipeline_mode = #tpu.pipeline_mode<synchronous>, transform_indices = @transform_1, window_bounds = array<i64: 5, 2>}, {pipeline_mode = #tpu.pipeline_mode<synchronous>, transform_indices = @transform_2, window_bounds = array<i64: 5, 1>}, {pipeline_mode = #tpu.pipeline_mode<synchronous>, transform_indices = @transform_3, window_bounds = array<i64: 5, 5>}, {pipeline_mode = #tpu.pipeline_mode<synchronous>, transform_indices = @transform_4, window_bounds = array<i64: 5, 1>}, {pipeline_mode = #tpu.pipeline_mode<synchronous>, transform_indices = @transform_5, window_bounds = array<i64: 1, 5>}, {pipeline_mode = #tpu.pipeline_mode<synchronous>, transform_indices = @transform_6, window_bounds = array<i64: 1, 1>}, {transform_indices = @transform_7, window_bounds = array<i64: 1, 1, 256>}]} {
    %c0 = arith.constant 0 : index
    %c0_0 = arith.constant 0 : index
    %c0_1 = arith.constant 0 : index
    %0 = vector.load %arg2[%c0, %c0_0, %c0_1] : memref<1x2x256xf32, #tpu.memory_space<vmem>>, vector<1x2x256xf32>
    %1 = vector.shape_cast %0 : vector<1x2x256xf32> to vector<2x256xf32>
    %c0_2 = arith.constant 0 : index
    %c0_3 = arith.constant 0 : index
    %2 = vector.load %arg3[%c0_2, %c0_3] : memref<5x2xf32, #tpu.memory_space<vmem>>, vector<5x2xf32>
    %c0_4 = arith.constant 0 : index
    %c0_5 = arith.constant 0 : index
    %3 = vector.load %arg4[%c0_4, %c0_5] : memref<5x1xf32, #tpu.memory_space<vmem>>, vector<5x1xf32>
    %4 = vector.extract_strided_slice %2 {offsets = [0, 0], sizes = [5, 1], strides = [1, 1]} : vector<5x2xf32> to vector<5x1xf32>
    %5 = vector.shape_cast %4 : vector<5x1xf32> to vector<5x1xf32>
    %6 = vector.broadcast %5 : vector<5x1xf32> to vector<5x256xf32>
    %7 = vector.extract_strided_slice %2 {offsets = [0, 1], sizes = [5, 1], strides = [1, 1]} : vector<5x2xf32> to vector<5x1xf32>
    %8 = vector.shape_cast %7 : vector<5x1xf32> to vector<5x1xf32>
    %9 = vector.broadcast %8 : vector<5x1xf32> to vector<5x256xf32>
    %10 = vector.shape_cast %3 : vector<5x1xf32> to vector<5x1xf32>
    %11 = vector.broadcast %10 : vector<5x1xf32> to vector<5x256xf32>
    %cst = arith.constant 0.000000e+00 : f32
    %12 = vector.broadcast %cst : f32 to vector<5x256xf32>
    %cst_6 = arith.constant 0xFF800000 : f32
    %13 = vector.broadcast %cst_6 : f32 to vector<5x256xf32>
    %14 = vector.extract_strided_slice %1 {offsets = [0, 0], sizes = [1, 256], strides = [1, 1]} : vector<2x256xf32> to vector<1x256xf32>
    %15 = vector.broadcast %14 : vector<1x256xf32> to vector<2x256xf32>
    %16 = arith.cmpf oge, %1, %15 : vector<2x256xf32>
    %17 = vector.extract_strided_slice %16 {offsets = [0, 0], sizes = [1, 256], strides = [1, 1]} : vector<2x256xi1> to vector<1x256xi1>
    %cst_7 = arith.constant 0.000000e+00 : f32
    %18 = vector.shape_cast %17 : vector<1x256xi1> to vector<1x256xi1>
    %19 = vector.broadcast %18 : vector<1x256xi1> to vector<5x256xi1>
    %20 = vector.broadcast %cst_7 : f32 to vector<5x256xf32>
    %21 = arith.select %19, %6, %20 : vector<5x256xi1>, vector<5x256xf32>
    %22 = arith.addf %12, %21 : vector<5x256xf32>
    %23 = vector.extract_strided_slice %16 {offsets = [1, 0], sizes = [1, 256], strides = [1, 1]} : vector<2x256xi1> to vector<1x256xi1>
    %cst_8 = arith.constant 0.000000e+00 : f32
    %24 = vector.shape_cast %23 : vector<1x256xi1> to vector<1x256xi1>
    %25 = vector.broadcast %24 : vector<1x256xi1> to vector<5x256xi1>
    %26 = vector.broadcast %cst_8 : f32 to vector<5x256xf32>
    %27 = arith.select %25, %9, %26 : vector<5x256xi1>, vector<5x256xf32>
    %28 = arith.addf %22, %27 : vector<5x256xf32>
    %29 = arith.cmpf oge, %28, %11 : vector<5x256xf32>
    %30 = vector.broadcast %14 : vector<1x256xf32> to vector<5x256xf32>
    %31 = arith.maximumf %13, %30 : vector<5x256xf32>
    %32 = arith.select %29, %31, %13 : vector<5x256xi1>, vector<5x256xf32>
    %33 = vector.extract_strided_slice %1 {offsets = [1, 0], sizes = [1, 256], strides = [1, 1]} : vector<2x256xf32> to vector<1x256xf32>
    %34 = vector.broadcast %33 : vector<1x256xf32> to vector<2x256xf32>
    %35 = arith.cmpf oge, %1, %34 : vector<2x256xf32>
    %36 = vector.extract_strided_slice %35 {offsets = [0, 0], sizes = [1, 256], strides = [1, 1]} : vector<2x256xi1> to vector<1x256xi1>
    %cst_9 = arith.constant 0.000000e+00 : f32
    %37 = vector.shape_cast %36 : vector<1x256xi1> to vector<1x256xi1>
    %38 = vector.broadcast %37 : vector<1x256xi1> to vector<5x256xi1>
    %39 = vector.broadcast %cst_9 : f32 to vector<5x256xf32>
    %40 = arith.select %38, %6, %39 : vector<5x256xi1>, vector<5x256xf32>
    %41 = arith.addf %12, %40 : vector<5x256xf32>
    %42 = vector.extract_strided_slice %35 {offsets = [1, 0], sizes = [1, 256], strides = [1, 1]} : vector<2x256xi1> to vector<1x256xi1>
    %cst_10 = arith.constant 0.000000e+00 : f32
    %43 = vector.shape_cast %42 : vector<1x256xi1> to vector<1x256xi1>
    %44 = vector.broadcast %43 : vector<1x256xi1> to vector<5x256xi1>
    %45 = vector.broadcast %cst_10 : f32 to vector<5x256xf32>
    %46 = arith.select %44, %9, %45 : vector<5x256xi1>, vector<5x256xf32>
    %47 = arith.addf %41, %46 : vector<5x256xf32>
    %48 = arith.cmpf oge, %47, %11 : vector<5x256xf32>
    %49 = vector.broadcast %33 : vector<1x256xf32> to vector<5x256xf32>
    %50 = arith.maximumf %32, %49 : vector<5x256xf32>
    %51 = arith.select %48, %50, %32 : vector<5x256xi1>, vector<5x256xf32>
    %c0_11 = arith.constant 0 : index
    %c0_12 = arith.constant 0 : index
    %52 = vector.load %arg5[%c0_11, %c0_12] : memref<5x5xf32, #tpu.memory_space<vmem>>, vector<5x5xf32>
    %c0_13 = arith.constant 0 : index
    %c0_14 = arith.constant 0 : index
    %53 = vector.load %arg6[%c0_13, %c0_14] : memref<5x1xf32, #tpu.memory_space<vmem>>, vector<5x1xf32>
    %54 = vector.extract_strided_slice %52 {offsets = [0, 0], sizes = [5, 1], strides = [1, 1]} : vector<5x5xf32> to vector<5x1xf32>
    %55 = vector.shape_cast %54 : vector<5x1xf32> to vector<5x1xf32>
    %56 = vector.broadcast %55 : vector<5x1xf32> to vector<5x256xf32>
    %57 = vector.extract_strided_slice %52 {offsets = [0, 1], sizes = [5, 1], strides = [1, 1]} : vector<5x5xf32> to vector<5x1xf32>
    %58 = vector.shape_cast %57 : vector<5x1xf32> to vector<5x1xf32>
    %59 = vector.broadcast %58 : vector<5x1xf32> to vector<5x256xf32>
    %60 = vector.extract_strided_slice %52 {offsets = [0, 2], sizes = [5, 1], strides = [1, 1]} : vector<5x5xf32> to vector<5x1xf32>
    %61 = vector.shape_cast %60 : vector<5x1xf32> to vector<5x1xf32>
    %62 = vector.broadcast %61 : vector<5x1xf32> to vector<5x256xf32>
    %63 = vector.extract_strided_slice %52 {offsets = [0, 3], sizes = [5, 1], strides = [1, 1]} : vector<5x5xf32> to vector<5x1xf32>
    %64 = vector.shape_cast %63 : vector<5x1xf32> to vector<5x1xf32>
    %65 = vector.broadcast %64 : vector<5x1xf32> to vector<5x256xf32>
    %66 = vector.extract_strided_slice %52 {offsets = [0, 4], sizes = [5, 1], strides = [1, 1]} : vector<5x5xf32> to vector<5x1xf32>
    %67 = vector.shape_cast %66 : vector<5x1xf32> to vector<5x1xf32>
    %68 = vector.broadcast %67 : vector<5x1xf32> to vector<5x256xf32>
    %69 = vector.shape_cast %53 : vector<5x1xf32> to vector<5x1xf32>
    %70 = vector.broadcast %69 : vector<5x1xf32> to vector<5x256xf32>
    %cst_15 = arith.constant 0.000000e+00 : f32
    %71 = vector.broadcast %cst_15 : f32 to vector<5x256xf32>
    %cst_16 = arith.constant 0xFF800000 : f32
    %72 = vector.broadcast %cst_16 : f32 to vector<5x256xf32>
    %73 = vector.extract_strided_slice %51 {offsets = [0, 0], sizes = [1, 256], strides = [1, 1]} : vector<5x256xf32> to vector<1x256xf32>
    %74 = vector.broadcast %73 : vector<1x256xf32> to vector<5x256xf32>
    %75 = arith.cmpf oge, %51, %74 : vector<5x256xf32>
    %76 = vector.extract_strided_slice %75 {offsets = [0, 0], sizes = [1, 256], strides = [1, 1]} : vector<5x256xi1> to vector<1x256xi1>
    %cst_17 = arith.constant 0.000000e+00 : f32
    %77 = vector.shape_cast %76 : vector<1x256xi1> to vector<1x256xi1>
    %78 = vector.broadcast %77 : vector<1x256xi1> to vector<5x256xi1>
    %79 = vector.broadcast %cst_17 : f32 to vector<5x256xf32>
    %80 = arith.select %78, %56, %79 : vector<5x256xi1>, vector<5x256xf32>
    %81 = arith.addf %71, %80 : vector<5x256xf32>
    %82 = vector.extract_strided_slice %75 {offsets = [1, 0], sizes = [1, 256], strides = [1, 1]} : vector<5x256xi1> to vector<1x256xi1>
    %cst_18 = arith.constant 0.000000e+00 : f32
    %83 = vector.shape_cast %82 : vector<1x256xi1> to vector<1x256xi1>
    %84 = vector.broadcast %83 : vector<1x256xi1> to vector<5x256xi1>
    %85 = vector.broadcast %cst_18 : f32 to vector<5x256xf32>
    %86 = arith.select %84, %59, %85 : vector<5x256xi1>, vector<5x256xf32>
    %87 = arith.addf %81, %86 : vector<5x256xf32>
    %88 = vector.extract_strided_slice %75 {offsets = [2, 0], sizes = [1, 256], strides = [1, 1]} : vector<5x256xi1> to vector<1x256xi1>
    %cst_19 = arith.constant 0.000000e+00 : f32
    %89 = vector.shape_cast %88 : vector<1x256xi1> to vector<1x256xi1>
    %90 = vector.broadcast %89 : vector<1x256xi1> to vector<5x256xi1>
    %91 = vector.broadcast %cst_19 : f32 to vector<5x256xf32>
    %92 = arith.select %90, %62, %91 : vector<5x256xi1>, vector<5x256xf32>
    %93 = arith.addf %87, %92 : vector<5x256xf32>
    %94 = vector.extract_strided_slice %75 {offsets = [3, 0], sizes = [1, 256], strides = [1, 1]} : vector<5x256xi1> to vector<1x256xi1>
    %cst_20 = arith.constant 0.000000e+00 : f32
    %95 = vector.shape_cast %94 : vector<1x256xi1> to vector<1x256xi1>
    %96 = vector.broadcast %95 : vector<1x256xi1> to vector<5x256xi1>
    %97 = vector.broadcast %cst_20 : f32 to vector<5x256xf32>
    %98 = arith.select %96, %65, %97 : vector<5x256xi1>, vector<5x256xf32>
    %99 = arith.addf %93, %98 : vector<5x256xf32>
    %100 = vector.extract_strided_slice %75 {offsets = [4, 0], sizes = [1, 256], strides = [1, 1]} : vector<5x256xi1> to vector<1x256xi1>
    %cst_21 = arith.constant 0.000000e+00 : f32
    %101 = vector.shape_cast %100 : vector<1x256xi1> to vector<1x256xi1>
    %102 = vector.broadcast %101 : vector<1x256xi1> to vector<5x256xi1>
    %103 = vector.broadcast %cst_21 : f32 to vector<5x256xf32>
    %104 = arith.select %102, %68, %103 : vector<5x256xi1>, vector<5x256xf32>
    %105 = arith.addf %99, %104 : vector<5x256xf32>
    %106 = arith.cmpf oge, %105, %70 : vector<5x256xf32>
    %107 = vector.broadcast %73 : vector<1x256xf32> to vector<5x256xf32>
    %108 = arith.maximumf %72, %107 : vector<5x256xf32>
    %109 = arith.select %106, %108, %72 : vector<5x256xi1>, vector<5x256xf32>
    %110 = vector.extract_strided_slice %51 {offsets = [1, 0], sizes = [1, 256], strides = [1, 1]} : vector<5x256xf32> to vector<1x256xf32>
    %111 = vector.broadcast %110 : vector<1x256xf32> to vector<5x256xf32>
    %112 = arith.cmpf oge, %51, %111 : vector<5x256xf32>
    %113 = vector.extract_strided_slice %112 {offsets = [0, 0], sizes = [1, 256], strides = [1, 1]} : vector<5x256xi1> to vector<1x256xi1>
    %cst_22 = arith.constant 0.000000e+00 : f32
    %114 = vector.shape_cast %113 : vector<1x256xi1> to vector<1x256xi1>
    %115 = vector.broadcast %114 : vector<1x256xi1> to vector<5x256xi1>
    %116 = vector.broadcast %cst_22 : f32 to vector<5x256xf32>
    %117 = arith.select %115, %56, %116 : vector<5x256xi1>, vector<5x256xf32>
    %118 = arith.addf %71, %117 : vector<5x256xf32>
    %119 = vector.extract_strided_slice %112 {offsets = [1, 0], sizes = [1, 256], strides = [1, 1]} : vector<5x256xi1> to vector<1x256xi1>
    %cst_23 = arith.constant 0.000000e+00 : f32
    %120 = vector.shape_cast %119 : vector<1x256xi1> to vector<1x256xi1>
    %121 = vector.broadcast %120 : vector<1x256xi1> to vector<5x256xi1>
    %122 = vector.broadcast %cst_23 : f32 to vector<5x256xf32>
    %123 = arith.select %121, %59, %122 : vector<5x256xi1>, vector<5x256xf32>
    %124 = arith.addf %118, %123 : vector<5x256xf32>
    %125 = vector.extract_strided_slice %112 {offsets = [2, 0], sizes = [1, 256], strides = [1, 1]} : vector<5x256xi1> to vector<1x256xi1>
    %cst_24 = arith.constant 0.000000e+00 : f32
    %126 = vector.shape_cast %125 : vector<1x256xi1> to vector<1x256xi1>
    %127 = vector.broadcast %126 : vector<1x256xi1> to vector<5x256xi1>
    %128 = vector.broadcast %cst_24 : f32 to vector<5x256xf32>
    %129 = arith.select %127, %62, %128 : vector<5x256xi1>, vector<5x256xf32>
    %130 = arith.addf %124, %129 : vector<5x256xf32>
    %131 = vector.extract_strided_slice %112 {offsets = [3, 0], sizes = [1, 256], strides = [1, 1]} : vector<5x256xi1> to vector<1x256xi1>
    %cst_25 = arith.constant 0.000000e+00 : f32
    %132 = vector.shape_cast %131 : vector<1x256xi1> to vector<1x256xi1>
    %133 = vector.broadcast %132 : vector<1x256xi1> to vector<5x256xi1>
    %134 = vector.broadcast %cst_25 : f32 to vector<5x256xf32>
    %135 = arith.select %133, %65, %134 : vector<5x256xi1>, vector<5x256xf32>
    %136 = arith.addf %130, %135 : vector<5x256xf32>
    %137 = vector.extract_strided_slice %112 {offsets = [4, 0], sizes = [1, 256], strides = [1, 1]} : vector<5x256xi1> to vector<1x256xi1>
    %cst_26 = arith.constant 0.000000e+00 : f32
    %138 = vector.shape_cast %137 : vector<1x256xi1> to vector<1x256xi1>
    %139 = vector.broadcast %138 : vector<1x256xi1> to vector<5x256xi1>
    %140 = vector.broadcast %cst_26 : f32 to vector<5x256xf32>
    %141 = arith.select %139, %68, %140 : vector<5x256xi1>, vector<5x256xf32>
    %142 = arith.addf %136, %141 : vector<5x256xf32>
    %143 = arith.cmpf oge, %142, %70 : vector<5x256xf32>
    %144 = vector.broadcast %110 : vector<1x256xf32> to vector<5x256xf32>
    %145 = arith.maximumf %109, %144 : vector<5x256xf32>
    %146 = arith.select %143, %145, %109 : vector<5x256xi1>, vector<5x256xf32>
    %147 = vector.extract_strided_slice %51 {offsets = [2, 0], sizes = [1, 256], strides = [1, 1]} : vector<5x256xf32> to vector<1x256xf32>
    %148 = vector.broadcast %147 : vector<1x256xf32> to vector<5x256xf32>
    %149 = arith.cmpf oge, %51, %148 : vector<5x256xf32>
    %150 = vector.extract_strided_slice %149 {offsets = [0, 0], sizes = [1, 256], strides = [1, 1]} : vector<5x256xi1> to vector<1x256xi1>
    %cst_27 = arith.constant 0.000000e+00 : f32
    %151 = vector.shape_cast %150 : vector<1x256xi1> to vector<1x256xi1>
    %152 = vector.broadcast %151 : vector<1x256xi1> to vector<5x256xi1>
    %153 = vector.broadcast %cst_27 : f32 to vector<5x256xf32>
    %154 = arith.select %152, %56, %153 : vector<5x256xi1>, vector<5x256xf32>
    %155 = arith.addf %71, %154 : vector<5x256xf32>
    %156 = vector.extract_strided_slice %149 {offsets = [1, 0], sizes = [1, 256], strides = [1, 1]} : vector<5x256xi1> to vector<1x256xi1>
    %cst_28 = arith.constant 0.000000e+00 : f32
    %157 = vector.shape_cast %156 : vector<1x256xi1> to vector<1x256xi1>
    %158 = vector.broadcast %157 : vector<1x256xi1> to vector<5x256xi1>
    %159 = vector.broadcast %cst_28 : f32 to vector<5x256xf32>
    %160 = arith.select %158, %59, %159 : vector<5x256xi1>, vector<5x256xf32>
    %161 = arith.addf %155, %160 : vector<5x256xf32>
    %162 = vector.extract_strided_slice %149 {offsets = [2, 0], sizes = [1, 256], strides = [1, 1]} : vector<5x256xi1> to vector<1x256xi1>
    %cst_29 = arith.constant 0.000000e+00 : f32
    %163 = vector.shape_cast %162 : vector<1x256xi1> to vector<1x256xi1>
    %164 = vector.broadcast %163 : vector<1x256xi1> to vector<5x256xi1>
    %165 = vector.broadcast %cst_29 : f32 to vector<5x256xf32>
    %166 = arith.select %164, %62, %165 : vector<5x256xi1>, vector<5x256xf32>
    %167 = arith.addf %161, %166 : vector<5x256xf32>
    %168 = vector.extract_strided_slice %149 {offsets = [3, 0], sizes = [1, 256], strides = [1, 1]} : vector<5x256xi1> to vector<1x256xi1>
    %cst_30 = arith.constant 0.000000e+00 : f32
    %169 = vector.shape_cast %168 : vector<1x256xi1> to vector<1x256xi1>
    %170 = vector.broadcast %169 : vector<1x256xi1> to vector<5x256xi1>
    %171 = vector.broadcast %cst_30 : f32 to vector<5x256xf32>
    %172 = arith.select %170, %65, %171 : vector<5x256xi1>, vector<5x256xf32>
    %173 = arith.addf %167, %172 : vector<5x256xf32>
    %174 = vector.extract_strided_slice %149 {offsets = [4, 0], sizes = [1, 256], strides = [1, 1]} : vector<5x256xi1> to vector<1x256xi1>
    %cst_31 = arith.constant 0.000000e+00 : f32
    %175 = vector.shape_cast %174 : vector<1x256xi1> to vector<1x256xi1>
    %176 = vector.broadcast %175 : vector<1x256xi1> to vector<5x256xi1>
    %177 = vector.broadcast %cst_31 : f32 to vector<5x256xf32>
    %178 = arith.select %176, %68, %177 : vector<5x256xi1>, vector<5x256xf32>
    %179 = arith.addf %173, %178 : vector<5x256xf32>
    %180 = arith.cmpf oge, %179, %70 : vector<5x256xf32>
    %181 = vector.broadcast %147 : vector<1x256xf32> to vector<5x256xf32>
    %182 = arith.maximumf %146, %181 : vector<5x256xf32>
    %183 = arith.select %180, %182, %146 : vector<5x256xi1>, vector<5x256xf32>
    %184 = vector.extract_strided_slice %51 {offsets = [3, 0], sizes = [1, 256], strides = [1, 1]} : vector<5x256xf32> to vector<1x256xf32>
    %185 = vector.broadcast %184 : vector<1x256xf32> to vector<5x256xf32>
    %186 = arith.cmpf oge, %51, %185 : vector<5x256xf32>
    %187 = vector.extract_strided_slice %186 {offsets = [0, 0], sizes = [1, 256], strides = [1, 1]} : vector<5x256xi1> to vector<1x256xi1>
    %cst_32 = arith.constant 0.000000e+00 : f32
    %188 = vector.shape_cast %187 : vector<1x256xi1> to vector<1x256xi1>
    %189 = vector.broadcast %188 : vector<1x256xi1> to vector<5x256xi1>
    %190 = vector.broadcast %cst_32 : f32 to vector<5x256xf32>
    %191 = arith.select %189, %56, %190 : vector<5x256xi1>, vector<5x256xf32>
    %192 = arith.addf %71, %191 : vector<5x256xf32>
    %193 = vector.extract_strided_slice %186 {offsets = [1, 0], sizes = [1, 256], strides = [1, 1]} : vector<5x256xi1> to vector<1x256xi1>
    %cst_33 = arith.constant 0.000000e+00 : f32
    %194 = vector.shape_cast %193 : vector<1x256xi1> to vector<1x256xi1>
    %195 = vector.broadcast %194 : vector<1x256xi1> to vector<5x256xi1>
    %196 = vector.broadcast %cst_33 : f32 to vector<5x256xf32>
    %197 = arith.select %195, %59, %196 : vector<5x256xi1>, vector<5x256xf32>
    %198 = arith.addf %192, %197 : vector<5x256xf32>
    %199 = vector.extract_strided_slice %186 {offsets = [2, 0], sizes = [1, 256], strides = [1, 1]} : vector<5x256xi1> to vector<1x256xi1>
    %cst_34 = arith.constant 0.000000e+00 : f32
    %200 = vector.shape_cast %199 : vector<1x256xi1> to vector<1x256xi1>
    %201 = vector.broadcast %200 : vector<1x256xi1> to vector<5x256xi1>
    %202 = vector.broadcast %cst_34 : f32 to vector<5x256xf32>
    %203 = arith.select %201, %62, %202 : vector<5x256xi1>, vector<5x256xf32>
    %204 = arith.addf %198, %203 : vector<5x256xf32>
    %205 = vector.extract_strided_slice %186 {offsets = [3, 0], sizes = [1, 256], strides = [1, 1]} : vector<5x256xi1> to vector<1x256xi1>
    %cst_35 = arith.constant 0.000000e+00 : f32
    %206 = vector.shape_cast %205 : vector<1x256xi1> to vector<1x256xi1>
    %207 = vector.broadcast %206 : vector<1x256xi1> to vector<5x256xi1>
    %208 = vector.broadcast %cst_35 : f32 to vector<5x256xf32>
    %209 = arith.select %207, %65, %208 : vector<5x256xi1>, vector<5x256xf32>
    %210 = arith.addf %204, %209 : vector<5x256xf32>
    %211 = vector.extract_strided_slice %186 {offsets = [4, 0], sizes = [1, 256], strides = [1, 1]} : vector<5x256xi1> to vector<1x256xi1>
    %cst_36 = arith.constant 0.000000e+00 : f32
    %212 = vector.shape_cast %211 : vector<1x256xi1> to vector<1x256xi1>
    %213 = vector.broadcast %212 : vector<1x256xi1> to vector<5x256xi1>
    %214 = vector.broadcast %cst_36 : f32 to vector<5x256xf32>
    %215 = arith.select %213, %68, %214 : vector<5x256xi1>, vector<5x256xf32>
    %216 = arith.addf %210, %215 : vector<5x256xf32>
    %217 = arith.cmpf oge, %216, %70 : vector<5x256xf32>
    %218 = vector.broadcast %184 : vector<1x256xf32> to vector<5x256xf32>
    %219 = arith.maximumf %183, %218 : vector<5x256xf32>
    %220 = arith.select %217, %219, %183 : vector<5x256xi1>, vector<5x256xf32>
    %221 = vector.extract_strided_slice %51 {offsets = [4, 0], sizes = [1, 256], strides = [1, 1]} : vector<5x256xf32> to vector<1x256xf32>
    %222 = vector.broadcast %221 : vector<1x256xf32> to vector<5x256xf32>
    %223 = arith.cmpf oge, %51, %222 : vector<5x256xf32>
    %224 = vector.extract_strided_slice %223 {offsets = [0, 0], sizes = [1, 256], strides = [1, 1]} : vector<5x256xi1> to vector<1x256xi1>
    %cst_37 = arith.constant 0.000000e+00 : f32
    %225 = vector.shape_cast %224 : vector<1x256xi1> to vector<1x256xi1>
    %226 = vector.broadcast %225 : vector<1x256xi1> to vector<5x256xi1>
    %227 = vector.broadcast %cst_37 : f32 to vector<5x256xf32>
    %228 = arith.select %226, %56, %227 : vector<5x256xi1>, vector<5x256xf32>
    %229 = arith.addf %71, %228 : vector<5x256xf32>
    %230 = vector.extract_strided_slice %223 {offsets = [1, 0], sizes = [1, 256], strides = [1, 1]} : vector<5x256xi1> to vector<1x256xi1>
    %cst_38 = arith.constant 0.000000e+00 : f32
    %231 = vector.shape_cast %230 : vector<1x256xi1> to vector<1x256xi1>
    %232 = vector.broadcast %231 : vector<1x256xi1> to vector<5x256xi1>
    %233 = vector.broadcast %cst_38 : f32 to vector<5x256xf32>
    %234 = arith.select %232, %59, %233 : vector<5x256xi1>, vector<5x256xf32>
    %235 = arith.addf %229, %234 : vector<5x256xf32>
    %236 = vector.extract_strided_slice %223 {offsets = [2, 0], sizes = [1, 256], strides = [1, 1]} : vector<5x256xi1> to vector<1x256xi1>
    %cst_39 = arith.constant 0.000000e+00 : f32
    %237 = vector.shape_cast %236 : vector<1x256xi1> to vector<1x256xi1>
    %238 = vector.broadcast %237 : vector<1x256xi1> to vector<5x256xi1>
    %239 = vector.broadcast %cst_39 : f32 to vector<5x256xf32>
    %240 = arith.select %238, %62, %239 : vector<5x256xi1>, vector<5x256xf32>
    %241 = arith.addf %235, %240 : vector<5x256xf32>
    %242 = vector.extract_strided_slice %223 {offsets = [3, 0], sizes = [1, 256], strides = [1, 1]} : vector<5x256xi1> to vector<1x256xi1>
    %cst_40 = arith.constant 0.000000e+00 : f32
    %243 = vector.shape_cast %242 : vector<1x256xi1> to vector<1x256xi1>
    %244 = vector.broadcast %243 : vector<1x256xi1> to vector<5x256xi1>
    %245 = vector.broadcast %cst_40 : f32 to vector<5x256xf32>
    %246 = arith.select %244, %65, %245 : vector<5x256xi1>, vector<5x256xf32>
    %247 = arith.addf %241, %246 : vector<5x256xf32>
    %248 = vector.extract_strided_slice %223 {offsets = [4, 0], sizes = [1, 256], strides = [1, 1]} : vector<5x256xi1> to vector<1x256xi1>
    %cst_41 = arith.constant 0.000000e+00 : f32
    %249 = vector.shape_cast %248 : vector<1x256xi1> to vector<1x256xi1>
    %250 = vector.broadcast %249 : vector<1x256xi1> to vector<5x256xi1>
    %251 = vector.broadcast %cst_41 : f32 to vector<5x256xf32>
    %252 = arith.select %250, %68, %251 : vector<5x256xi1>, vector<5x256xf32>
    %253 = arith.addf %247, %252 : vector<5x256xf32>
    %254 = arith.cmpf oge, %253, %70 : vector<5x256xf32>
    %255 = vector.broadcast %221 : vector<1x256xf32> to vector<5x256xf32>
    %256 = arith.maximumf %220, %255 : vector<5x256xf32>
    %257 = arith.select %254, %256, %220 : vector<5x256xi1>, vector<5x256xf32>
    %c0_42 = arith.constant 0 : index
    %c0_43 = arith.constant 0 : index
    %258 = vector.load %arg7[%c0_42, %c0_43] : memref<1x5xf32, #tpu.memory_space<vmem>>, vector<1x5xf32>
    %c0_44 = arith.constant 0 : index
    %c0_45 = arith.constant 0 : index
    %259 = vector.load %arg8[%c0_44, %c0_45] : memref<1x1xf32, #tpu.memory_space<vmem>>, vector<1x1xf32>
    %260 = vector.extract_strided_slice %258 {offsets = [0, 0], sizes = [1, 1], strides = [1, 1]} : vector<1x5xf32> to vector<1x1xf32>
    %261 = vector.shape_cast %260 : vector<1x1xf32> to vector<1x1xf32>
    %262 = vector.broadcast %261 : vector<1x1xf32> to vector<1x256xf32>
    %263 = vector.extract_strided_slice %258 {offsets = [0, 1], sizes = [1, 1], strides = [1, 1]} : vector<1x5xf32> to vector<1x1xf32>
    %264 = vector.shape_cast %263 : vector<1x1xf32> to vector<1x1xf32>
    %265 = vector.broadcast %264 : vector<1x1xf32> to vector<1x256xf32>
    %266 = vector.extract_strided_slice %258 {offsets = [0, 2], sizes = [1, 1], strides = [1, 1]} : vector<1x5xf32> to vector<1x1xf32>
    %267 = vector.shape_cast %266 : vector<1x1xf32> to vector<1x1xf32>
    %268 = vector.broadcast %267 : vector<1x1xf32> to vector<1x256xf32>
    %269 = vector.extract_strided_slice %258 {offsets = [0, 3], sizes = [1, 1], strides = [1, 1]} : vector<1x5xf32> to vector<1x1xf32>
    %270 = vector.shape_cast %269 : vector<1x1xf32> to vector<1x1xf32>
    %271 = vector.broadcast %270 : vector<1x1xf32> to vector<1x256xf32>
    %272 = vector.extract_strided_slice %258 {offsets = [0, 4], sizes = [1, 1], strides = [1, 1]} : vector<1x5xf32> to vector<1x1xf32>
    %273 = vector.shape_cast %272 : vector<1x1xf32> to vector<1x1xf32>
    %274 = vector.broadcast %273 : vector<1x1xf32> to vector<1x256xf32>
    %275 = vector.shape_cast %259 : vector<1x1xf32> to vector<1x1xf32>
    %276 = vector.broadcast %275 : vector<1x1xf32> to vector<1x256xf32>
    %cst_46 = arith.constant 0.000000e+00 : f32
    %277 = vector.broadcast %cst_46 : f32 to vector<1x256xf32>
    %cst_47 = arith.constant 0xFF800000 : f32
    %278 = vector.broadcast %cst_47 : f32 to vector<1x256xf32>
    %279 = vector.extract_strided_slice %257 {offsets = [0, 0], sizes = [1, 256], strides = [1, 1]} : vector<5x256xf32> to vector<1x256xf32>
    %280 = vector.broadcast %279 : vector<1x256xf32> to vector<5x256xf32>
    %281 = arith.cmpf oge, %257, %280 : vector<5x256xf32>
    %282 = vector.extract_strided_slice %281 {offsets = [0, 0], sizes = [1, 256], strides = [1, 1]} : vector<5x256xi1> to vector<1x256xi1>
    %cst_48 = arith.constant 0.000000e+00 : f32
    %283 = vector.broadcast %cst_48 : f32 to vector<1x256xf32>
    %284 = arith.select %282, %262, %283 : vector<1x256xi1>, vector<1x256xf32>
    %285 = arith.addf %277, %284 : vector<1x256xf32>
    %286 = vector.extract_strided_slice %281 {offsets = [1, 0], sizes = [1, 256], strides = [1, 1]} : vector<5x256xi1> to vector<1x256xi1>
    %cst_49 = arith.constant 0.000000e+00 : f32
    %287 = vector.broadcast %cst_49 : f32 to vector<1x256xf32>
    %288 = arith.select %286, %265, %287 : vector<1x256xi1>, vector<1x256xf32>
    %289 = arith.addf %285, %288 : vector<1x256xf32>
    %290 = vector.extract_strided_slice %281 {offsets = [2, 0], sizes = [1, 256], strides = [1, 1]} : vector<5x256xi1> to vector<1x256xi1>
    %cst_50 = arith.constant 0.000000e+00 : f32
    %291 = vector.broadcast %cst_50 : f32 to vector<1x256xf32>
    %292 = arith.select %290, %268, %291 : vector<1x256xi1>, vector<1x256xf32>
    %293 = arith.addf %289, %292 : vector<1x256xf32>
    %294 = vector.extract_strided_slice %281 {offsets = [3, 0], sizes = [1, 256], strides = [1, 1]} : vector<5x256xi1> to vector<1x256xi1>
    %cst_51 = arith.constant 0.000000e+00 : f32
    %295 = vector.broadcast %cst_51 : f32 to vector<1x256xf32>
    %296 = arith.select %294, %271, %295 : vector<1x256xi1>, vector<1x256xf32>
    %297 = arith.addf %293, %296 : vector<1x256xf32>
    %298 = vector.extract_strided_slice %281 {offsets = [4, 0], sizes = [1, 256], strides = [1, 1]} : vector<5x256xi1> to vector<1x256xi1>
    %cst_52 = arith.constant 0.000000e+00 : f32
    %299 = vector.broadcast %cst_52 : f32 to vector<1x256xf32>
    %300 = arith.select %298, %274, %299 : vector<1x256xi1>, vector<1x256xf32>
    %301 = arith.addf %297, %300 : vector<1x256xf32>
    %302 = arith.cmpf oge, %301, %276 : vector<1x256xf32>
    %303 = arith.maximumf %278, %279 : vector<1x256xf32>
    %304 = arith.select %302, %303, %278 : vector<1x256xi1>, vector<1x256xf32>
    %305 = vector.extract_strided_slice %257 {offsets = [1, 0], sizes = [1, 256], strides = [1, 1]} : vector<5x256xf32> to vector<1x256xf32>
    %306 = vector.broadcast %305 : vector<1x256xf32> to vector<5x256xf32>
    %307 = arith.cmpf oge, %257, %306 : vector<5x256xf32>
    %308 = vector.extract_strided_slice %307 {offsets = [0, 0], sizes = [1, 256], strides = [1, 1]} : vector<5x256xi1> to vector<1x256xi1>
    %cst_53 = arith.constant 0.000000e+00 : f32
    %309 = vector.broadcast %cst_53 : f32 to vector<1x256xf32>
    %310 = arith.select %308, %262, %309 : vector<1x256xi1>, vector<1x256xf32>
    %311 = arith.addf %277, %310 : vector<1x256xf32>
    %312 = vector.extract_strided_slice %307 {offsets = [1, 0], sizes = [1, 256], strides = [1, 1]} : vector<5x256xi1> to vector<1x256xi1>
    %cst_54 = arith.constant 0.000000e+00 : f32
    %313 = vector.broadcast %cst_54 : f32 to vector<1x256xf32>
    %314 = arith.select %312, %265, %313 : vector<1x256xi1>, vector<1x256xf32>
    %315 = arith.addf %311, %314 : vector<1x256xf32>
    %316 = vector.extract_strided_slice %307 {offsets = [2, 0], sizes = [1, 256], strides = [1, 1]} : vector<5x256xi1> to vector<1x256xi1>
    %cst_55 = arith.constant 0.000000e+00 : f32
    %317 = vector.broadcast %cst_55 : f32 to vector<1x256xf32>
    %318 = arith.select %316, %268, %317 : vector<1x256xi1>, vector<1x256xf32>
    %319 = arith.addf %315, %318 : vector<1x256xf32>
    %320 = vector.extract_strided_slice %307 {offsets = [3, 0], sizes = [1, 256], strides = [1, 1]} : vector<5x256xi1> to vector<1x256xi1>
    %cst_56 = arith.constant 0.000000e+00 : f32
    %321 = vector.broadcast %cst_56 : f32 to vector<1x256xf32>
    %322 = arith.select %320, %271, %321 : vector<1x256xi1>, vector<1x256xf32>
    %323 = arith.addf %319, %322 : vector<1x256xf32>
    %324 = vector.extract_strided_slice %307 {offsets = [4, 0], sizes = [1, 256], strides = [1, 1]} : vector<5x256xi1> to vector<1x256xi1>
    %cst_57 = arith.constant 0.000000e+00 : f32
    %325 = vector.broadcast %cst_57 : f32 to vector<1x256xf32>
    %326 = arith.select %324, %274, %325 : vector<1x256xi1>, vector<1x256xf32>
    %327 = arith.addf %323, %326 : vector<1x256xf32>
    %328 = arith.cmpf oge, %327, %276 : vector<1x256xf32>
    %329 = arith.maximumf %304, %305 : vector<1x256xf32>
    %330 = arith.select %328, %329, %304 : vector<1x256xi1>, vector<1x256xf32>
    %331 = vector.extract_strided_slice %257 {offsets = [2, 0], sizes = [1, 256], strides = [1, 1]} : vector<5x256xf32> to vector<1x256xf32>
    %332 = vector.broadcast %331 : vector<1x256xf32> to vector<5x256xf32>
    %333 = arith.cmpf oge, %257, %332 : vector<5x256xf32>
    %334 = vector.extract_strided_slice %333 {offsets = [0, 0], sizes = [1, 256], strides = [1, 1]} : vector<5x256xi1> to vector<1x256xi1>
    %cst_58 = arith.constant 0.000000e+00 : f32
    %335 = vector.broadcast %cst_58 : f32 to vector<1x256xf32>
    %336 = arith.select %334, %262, %335 : vector<1x256xi1>, vector<1x256xf32>
    %337 = arith.addf %277, %336 : vector<1x256xf32>
    %338 = vector.extract_strided_slice %333 {offsets = [1, 0], sizes = [1, 256], strides = [1, 1]} : vector<5x256xi1> to vector<1x256xi1>
    %cst_59 = arith.constant 0.000000e+00 : f32
    %339 = vector.broadcast %cst_59 : f32 to vector<1x256xf32>
    %340 = arith.select %338, %265, %339 : vector<1x256xi1>, vector<1x256xf32>
    %341 = arith.addf %337, %340 : vector<1x256xf32>
    %342 = vector.extract_strided_slice %333 {offsets = [2, 0], sizes = [1, 256], strides = [1, 1]} : vector<5x256xi1> to vector<1x256xi1>
    %cst_60 = arith.constant 0.000000e+00 : f32
    %343 = vector.broadcast %cst_60 : f32 to vector<1x256xf32>
    %344 = arith.select %342, %268, %343 : vector<1x256xi1>, vector<1x256xf32>
    %345 = arith.addf %341, %344 : vector<1x256xf32>
    %346 = vector.extract_strided_slice %333 {offsets = [3, 0], sizes = [1, 256], strides = [1, 1]} : vector<5x256xi1> to vector<1x256xi1>
    %cst_61 = arith.constant 0.000000e+00 : f32
    %347 = vector.broadcast %cst_61 : f32 to vector<1x256xf32>
    %348 = arith.select %346, %271, %347 : vector<1x256xi1>, vector<1x256xf32>
    %349 = arith.addf %345, %348 : vector<1x256xf32>
    %350 = vector.extract_strided_slice %333 {offsets = [4, 0], sizes = [1, 256], strides = [1, 1]} : vector<5x256xi1> to vector<1x256xi1>
    %cst_62 = arith.constant 0.000000e+00 : f32
    %351 = vector.broadcast %cst_62 : f32 to vector<1x256xf32>
    %352 = arith.select %350, %274, %351 : vector<1x256xi1>, vector<1x256xf32>
    %353 = arith.addf %349, %352 : vector<1x256xf32>
    %354 = arith.cmpf oge, %353, %276 : vector<1x256xf32>
    %355 = arith.maximumf %330, %331 : vector<1x256xf32>
    %356 = arith.select %354, %355, %330 : vector<1x256xi1>, vector<1x256xf32>
    %357 = vector.extract_strided_slice %257 {offsets = [3, 0], sizes = [1, 256], strides = [1, 1]} : vector<5x256xf32> to vector<1x256xf32>
    %358 = vector.broadcast %357 : vector<1x256xf32> to vector<5x256xf32>
    %359 = arith.cmpf oge, %257, %358 : vector<5x256xf32>
    %360 = vector.extract_strided_slice %359 {offsets = [0, 0], sizes = [1, 256], strides = [1, 1]} : vector<5x256xi1> to vector<1x256xi1>
    %cst_63 = arith.constant 0.000000e+00 : f32
    %361 = vector.broadcast %cst_63 : f32 to vector<1x256xf32>
    %362 = arith.select %360, %262, %361 : vector<1x256xi1>, vector<1x256xf32>
    %363 = arith.addf %277, %362 : vector<1x256xf32>
    %364 = vector.extract_strided_slice %359 {offsets = [1, 0], sizes = [1, 256], strides = [1, 1]} : vector<5x256xi1> to vector<1x256xi1>
    %cst_64 = arith.constant 0.000000e+00 : f32
    %365 = vector.broadcast %cst_64 : f32 to vector<1x256xf32>
    %366 = arith.select %364, %265, %365 : vector<1x256xi1>, vector<1x256xf32>
    %367 = arith.addf %363, %366 : vector<1x256xf32>
    %368 = vector.extract_strided_slice %359 {offsets = [2, 0], sizes = [1, 256], strides = [1, 1]} : vector<5x256xi1> to vector<1x256xi1>
    %cst_65 = arith.constant 0.000000e+00 : f32
    %369 = vector.broadcast %cst_65 : f32 to vector<1x256xf32>
    %370 = arith.select %368, %268, %369 : vector<1x256xi1>, vector<1x256xf32>
    %371 = arith.addf %367, %370 : vector<1x256xf32>
    %372 = vector.extract_strided_slice %359 {offsets = [3, 0], sizes = [1, 256], strides = [1, 1]} : vector<5x256xi1> to vector<1x256xi1>
    %cst_66 = arith.constant 0.000000e+00 : f32
    %373 = vector.broadcast %cst_66 : f32 to vector<1x256xf32>
    %374 = arith.select %372, %271, %373 : vector<1x256xi1>, vector<1x256xf32>
    %375 = arith.addf %371, %374 : vector<1x256xf32>
    %376 = vector.extract_strided_slice %359 {offsets = [4, 0], sizes = [1, 256], strides = [1, 1]} : vector<5x256xi1> to vector<1x256xi1>
    %cst_67 = arith.constant 0.000000e+00 : f32
    %377 = vector.broadcast %cst_67 : f32 to vector<1x256xf32>
    %378 = arith.select %376, %274, %377 : vector<1x256xi1>, vector<1x256xf32>
    %379 = arith.addf %375, %378 : vector<1x256xf32>
    %380 = arith.cmpf oge, %379, %276 : vector<1x256xf32>
    %381 = arith.maximumf %356, %357 : vector<1x256xf32>
    %382 = arith.select %380, %381, %356 : vector<1x256xi1>, vector<1x256xf32>
    %383 = vector.extract_strided_slice %257 {offsets = [4, 0], sizes = [1, 256], strides = [1, 1]} : vector<5x256xf32> to vector<1x256xf32>
    %384 = vector.broadcast %383 : vector<1x256xf32> to vector<5x256xf32>
    %385 = arith.cmpf oge, %257, %384 : vector<5x256xf32>
    %386 = vector.extract_strided_slice %385 {offsets = [0, 0], sizes = [1, 256], strides = [1, 1]} : vector<5x256xi1> to vector<1x256xi1>
    %cst_68 = arith.constant 0.000000e+00 : f32
    %387 = vector.broadcast %cst_68 : f32 to vector<1x256xf32>
    %388 = arith.select %386, %262, %387 : vector<1x256xi1>, vector<1x256xf32>
    %389 = arith.addf %277, %388 : vector<1x256xf32>
    %390 = vector.extract_strided_slice %385 {offsets = [1, 0], sizes = [1, 256], strides = [1, 1]} : vector<5x256xi1> to vector<1x256xi1>
    %cst_69 = arith.constant 0.000000e+00 : f32
    %391 = vector.broadcast %cst_69 : f32 to vector<1x256xf32>
    %392 = arith.select %390, %265, %391 : vector<1x256xi1>, vector<1x256xf32>
    %393 = arith.addf %389, %392 : vector<1x256xf32>
    %394 = vector.extract_strided_slice %385 {offsets = [2, 0], sizes = [1, 256], strides = [1, 1]} : vector<5x256xi1> to vector<1x256xi1>
    %cst_70 = arith.constant 0.000000e+00 : f32
    %395 = vector.broadcast %cst_70 : f32 to vector<1x256xf32>
    %396 = arith.select %394, %268, %395 : vector<1x256xi1>, vector<1x256xf32>
    %397 = arith.addf %393, %396 : vector<1x256xf32>
    %398 = vector.extract_strided_slice %385 {offsets = [3, 0], sizes = [1, 256], strides = [1, 1]} : vector<5x256xi1> to vector<1x256xi1>
    %cst_71 = arith.constant 0.000000e+00 : f32
    %399 = vector.broadcast %cst_71 : f32 to vector<1x256xf32>
    %400 = arith.select %398, %271, %399 : vector<1x256xi1>, vector<1x256xf32>
    %401 = arith.addf %397, %400 : vector<1x256xf32>
    %402 = vector.extract_strided_slice %385 {offsets = [4, 0], sizes = [1, 256], strides = [1, 1]} : vector<5x256xi1> to vector<1x256xi1>
    %cst_72 = arith.constant 0.000000e+00 : f32
    %403 = vector.broadcast %cst_72 : f32 to vector<1x256xf32>
    %404 = arith.select %402, %274, %403 : vector<1x256xi1>, vector<1x256xf32>
    %405 = arith.addf %401, %404 : vector<1x256xf32>
    %406 = arith.cmpf oge, %405, %276 : vector<1x256xf32>
    %407 = arith.maximumf %382, %383 : vector<1x256xf32>
    %408 = arith.select %406, %407, %382 : vector<1x256xi1>, vector<1x256xf32>
    %c0_73 = arith.constant 0 : index
    %c0_74 = arith.constant 0 : index
    %c0_75 = arith.constant 0 : index
    %409 = vector.load %arg9[%c0_73, %c0_74, %c0_75] : memref<1x1x256xf32, #tpu.memory_space<vmem>>, vector<1x1x256xf32>
    %410 = vector.shape_cast %409 : vector<1x1x256xf32> to vector<1x256xf32>
    %411 = vector.shape_cast %408 : vector<1x256xf32> to vector<1x1x256xf32>
    tpu.vector_store %arg9[%c0_73, %c0_74, %c0_75], %411 {strides = array<i32>} : memref<1x1x256xf32, #tpu.memory_space<vmem>>, vector<1x1x256xf32>,
    return
  }
  func.func @transform_0(%arg0: i32, %arg1: i32) -> (i32, i32, i32) {
    %c0_i32 = arith.constant 0 : i32
    %c0_i32_0 = arith.constant 0 : i32
    return %arg0, %c0_i32, %arg1 : i32, i32, i32
  }
  func.func @transform_1(%arg0: i32, %arg1: i32) -> (i32, i32) {
    %c0_i32 = arith.constant 0 : i32
    %c0_i32_0 = arith.constant 0 : i32
    %c0_i32_1 = arith.constant 0 : i32
    return %c0_i32, %c0_i32_0 : i32, i32
  }
  func.func @transform_2(%arg0: i32, %arg1: i32) -> (i32, i32) {
    %c0_i32 = arith.constant 0 : i32
    %c0_i32_0 = arith.constant 0 : i32
    %c0_i32_1 = arith.constant 0 : i32
    return %c0_i32, %c0_i32_0 : i32, i32
  }
  func.func @transform_3(%arg0: i32, %arg1: i32) -> (i32, i32) {
    %c0_i32 = arith.constant 0 : i32
    %c0_i32_0 = arith.constant 0 : i32
    %c0_i32_1 = arith.constant 0 : i32
    return %c0_i32, %c0_i32_0 : i32, i32
  }
  func.func @transform_4(%arg0: i32, %arg1: i32) -> (i32, i32) {
    %c0_i32 = arith.constant 0 : i32
    %c0_i32_0 = arith.constant 0 : i32
    %c0_i32_1 = arith.constant 0 : i32
    return %c0_i32, %c0_i32_0 : i32, i32
  }
  func.func @transform_5(%arg0: i32, %arg1: i32) -> (i32, i32) {
    %c0_i32 = arith.constant 0 : i32
    %c0_i32_0 = arith.constant 0 : i32
    %c0_i32_1 = arith.constant 0 : i32
    return %c0_i32, %c0_i32_0 : i32, i32
  }
  func.func @transform_6(%arg0: i32, %arg1: i32) -> (i32, i32) {
    %c0_i32 = arith.constant 0 : i32
    %c0_i32_0 = arith.constant 0 : i32
    %c0_i32_1 = arith.constant 0 : i32
    return %c0_i32, %c0_i32_0 : i32, i32
  }
  func.func @transform_7(%arg0: i32, %arg1: i32) -> (i32, i32, i32) {
    %c0_i32 = arith.constant 0 : i32
    %c0_i32_0 = arith.constant 0 : i32
    return %arg0, %c0_i32, %arg1 : i32, i32, i32
  }
}

</mosaic_0001>

<llo_original>
// kernel: net_forward.1
$region0: #{net_forward.1}
  #allocation0 [shape = 'u32[]', space=smem, size = 0x4, offset = 0x4, fixed_abs, tag = 'smem constant byte address 0x4 - core index']
  #allocation1 [shape = 'u32[144,128]{1,0:T(1,128)}', space=vmem, size = 0x12000, scoped, tag = 'internal scratch']
  #allocation2 [shape = 'f32[1,1]{1,0:T(1,128)S(1)}', space=vmem, size = 0x200, scoped, tag = 'scoped memory for net_forward.1']
  %s0 = inlined_call_operand.vmem [shape: f32[2,2,256], index: 0, kind: input, shape index: {}]
  %s1 = inlined_call_operand.vmem [shape: f32[5,2], index: 1, kind: input, shape index: {}]
  %s2 = inlined_call_operand.vmem [shape: f32[5,1], index: 2, kind: input, shape index: {}]
  %s3 = inlined_call_operand.vmem [shape: f32[5,5], index: 3, kind: input, shape index: {}]
  %s4 = inlined_call_operand.vmem [shape: f32[5,1], index: 4, kind: input, shape index: {}]
  %s5 = inlined_call_operand.vmem [shape: f32[1,5], index: 5, kind: input, shape index: {}]
  %s6 = inlined_call_operand.<no memory space> [shape: f32[1,1], index: 6, kind: input, shape index: {}]
  %s7 = inlined_call_operand.vmem [shape: f32[2,1,256], index: 7, kind: output, shape index: {}]
  %s8 = sld [smem:[#allocation0]]
  $region61: #{net_forward.1} parent=0
    _
  %s10 = ssub.s32 1, %s8
  %s11 = scalar_select 0, %s10, %s8
  %v12 = vstv %s6
  %13 = vst [vmem:[#allocation2] sm:$0x1] %v12
  loop: start=0, step=1, limit=4
  $region2: #{net_forward.1} parent=0 // loop_pre_header
    _
  $region3: #{net_forward.1} parent=0 // loop_header
    %s15 = sphi 0, %s19
    %p16 = scmp.ge.s32.totalorder %s15, 4
    %s22 = sphi 0, %s34
    %s23 = sphi 0, %s30
    %s24 = sphi 0, %s22
    %s25 = sphi 0, %s23
    %s26 = sphi 0, %s24
    %s27 = sphi 0, %s25
    %s39 = sphi 0, %s41
    %s42 = sphi 0, %s39
    %s43 = sphi 0, %s42
    %s59 = sphi 0, %s43
    %s63 = sphi 0, %s63
    %s65 = sphi 0, %s63
    %s66 = sphi 0, %s65
    %s80 = sphi 0, %s66
    %s84 = sphi 0, %s84
    %s86 = sphi 0, %s84
    %s87 = sphi 0, %s86
    %s101 = sphi 0, %s87
    %s105 = sphi 0, %s105
    %s107 = sphi 0, %s105
    %s108 = sphi 0, %s107
    %s122 = sphi 0, %s108
    %s126 = sphi 0, %s126
    %s128 = sphi 0, %s126
    %s129 = sphi 0, %s128
    %s143 = sphi 0, %s129
    %s147 = sphi 0, %s147
    %s149 = sphi 0, %s147
    %s150 = sphi 0, %s149
    %s164 = sphi 0, %s150
    %s168 = sphi 0, %s168
    %s170 = sphi 0, %s168
    %s171 = sphi 0, %s170
    %s185 = sphi 0, %s171
    %s193 = sphi 0, %s195
    %s196 = sphi 0, %s193
    %s197 = sphi 0, %s196
    %s213 = sphi 0, %s197
  $region4: #{net_forward.1} parent=0 // loop_header_branch
    %18 = sbr.rel (%p16) target = $region8
  $region5: #{net_forward.1} parent=0 // loop_body
    %s20 = ssub.s32 %s15, 1
    %s21 = ssub.s32 %s15, 2
    %s28 = sadd.s32 1, %s23
    %p29 = scmp.ge.s32.totalorder %s28, 1
    %s30 = scalar_select %p29, 0, %s28
    %s31 = sadd.s32 1, %s22
    %s32 = scalar_select %p29, %s31, %s22
    %p33 = scmp.ge.s32.totalorder %s32, 2
    %s34 = scalar_select %p33, 0, %s32
    %s35 = ssub.s32 %s22, %s34
    %s36 = ssub.s32 %s23, %s30
    %s37 = sor.u32 %s35, %s36
    %p38 = scmp.eq.s32.totalorder %s37, 0
    %s40 = sadd.s32 %s39, 1
    %s41 = scalar_select %p38, %s39, %s40
    %p44 = pneg %p38
    %p45 = scmp.eq.s32.totalorder %s15, 1
    %p46 = por %p44, %p45
    %p47 = scmp.ne.s32.totalorder %s39, %s42
    %p48 = scmp.eq.s32.totalorder %s15, 0
    %p49 = por %p47, %p48
    %p50 = scmp.ne.s32.totalorder %s39, %s42
    %p51 = scmp.eq.s32.totalorder %s20, 1
    %p52 = por %p50, %p51
    %p53 = scmp.ne.s32.totalorder %s42, %s43
    %p54 = scmp.eq.s32.totalorder %s20, 0
    %p55 = por %p53, %p54
    %p56 = scmp.ne.s32.totalorder %s42, %s43
    %p57 = scmp.eq.s32.totalorder %s21, 1
    %p58 = por %p56, %p57
    %p60 = scmp.ne.s32.totalorder %s43, %s59
    %p61 = scmp.eq.s32.totalorder %s21, 0
    %p62 = por %p60, %p61
    %s64 = sadd.s32 %s63, 1
    %p67 = scmp.eq.s32.totalorder %s15, 1
    %p68 = scmp.ne.s32.totalorder %s63, %s65
    %p69 = scmp.eq.s32.totalorder %s15, 0
    %p70 = por %p68, %p69
    %p71 = scmp.ne.s32.totalorder %s63, %s65
    %p72 = scmp.eq.s32.totalorder %s20, 1
    %p73 = por %p71, %p72
    %p74 = scmp.ne.s32.totalorder %s65, %s66
    %p75 = scmp.eq.s32.totalorder %s20, 0
    %p76 = por %p74, %p75
    %p77 = scmp.ne.s32.totalorder %s65, %s66
    %p78 = scmp.eq.s32.totalorder %s21, 1
    %p79 = por %p77, %p78
    %p81 = scmp.ne.s32.totalorder %s66, %s80
    %p82 = scmp.eq.s32.totalorder %s21, 0
    %p83 = por %p81, %p82
    %s85 = sadd.s32 %s84, 1
    %p88 = scmp.eq.s32.totalorder %s15, 1
    %p89 = scmp.ne.s32.totalorder %s84, %s86
    %p90 = scmp.eq.s32.totalorder %s15, 0
    %p91 = por %p89, %p90
    %p92 = scmp.ne.s32.totalorder %s84, %s86
    %p93 = scmp.eq.s32.totalorder %s20, 1
    %p94 = por %p92, %p93
    %p95 = scmp.ne.s32.totalorder %s86, %s87
    %p96 = scmp.eq.s32.totalorder %s20, 0
    %p97 = por %p95, %p96
    %p98 = scmp.ne.s32.totalorder %s86, %s87
    %p99 = scmp.eq.s32.totalorder %s21, 1
    %p100 = por %p98, %p99
    %p102 = scmp.ne.s32.totalorder %s87, %s101
    %p103 = scmp.eq.s32.totalorder %s21, 0
    %p104 = por %p102, %p103
    %s106 = sadd.s32 %s105, 1
    %p109 = scmp.eq.s32.totalorder %s15, 1
    %p110 = scmp.ne.s32.totalorder %s105, %s107
    %p111 = scmp.eq.s32.totalorder %s15, 0
    %p112 = por %p110, %p111
    %p113 = scmp.ne.s32.totalorder %s105, %s107
    %p114 = scmp.eq.s32.totalorder %s20, 1
    %p115 = por %p113, %p114
    %p116 = scmp.ne.s32.totalorder %s107, %s108
    %p117 = scmp.eq.s32.totalorder %s20, 0
    %p118 = por %p116, %p117
    %p119 = scmp.ne.s32.totalorder %s107, %s108
    %p120 = scmp.eq.s32.totalorder %s21, 1
    %p121 = por %p119, %p120
    %p123 = scmp.ne.s32.totalorder %s108, %s122
    %p124 = scmp.eq.s32.totalorder %s21, 0
    %p125 = por %p123, %p124
    %s127 = sadd.s32 %s126, 1
    %p130 = scmp.eq.s32.totalorder %s15, 1
    %p131 = scmp.ne.s32.totalorder %s126, %s128
    %p132 = scmp.eq.s32.totalorder %s15, 0
    %p133 = por %p131, %p132
    %p134 = scmp.ne.s32.totalorder %s126, %s128
    %p135 = scmp.eq.s32.totalorder %s20, 1
    %p136 = por %p134, %p135
    %p137 = scmp.ne.s32.totalorder %s128, %s129
    %p138 = scmp.eq.s32.totalorder %s20, 0
    %p139 = por %p137, %p138
    %p140 = scmp.ne.s32.totalorder %s128, %s129
    %p141 = scmp.eq.s32.totalorder %s21, 1
    %p142 = por %p140, %p141
    %p144 = scmp.ne.s32.totalorder %s129, %s143
    %p145 = scmp.eq.s32.totalorder %s21, 0
    %p146 = por %p144, %p145
    %s148 = sadd.s32 %s147, 1
    %p151 = scmp.eq.s32.totalorder %s15, 1
    %p152 = scmp.ne.s32.totalorder %s147, %s149
    %p153 = scmp.eq.s32.totalorder %s15, 0
    %p154 = por %p152, %p153
    %p155 = scmp.ne.s32.totalorder %s147, %s149
    %p156 = scmp.eq.s32.totalorder %s20, 1
    %p157 = por %p155, %p156
    %p158 = scmp.ne.s32.totalorder %s149, %s150
    %p159 = scmp.eq.s32.totalorder %s20, 0
    %p160 = por %p158, %p159
    %p161 = scmp.ne.s32.totalorder %s149, %s150
    %p162 = scmp.eq.s32.totalorder %s21, 1
    %p163 = por %p161, %p162
    %p165 = scmp.ne.s32.totalorder %s150, %s164
    %p166 = scmp.eq.s32.totalorder %s21, 0
    %p167 = por %p165, %p166
    %s169 = sadd.s32 %s168, 1
    %p172 = scmp.eq.s32.totalorder %s15, 1
    %p173 = scmp.ne.s32.totalorder %s168, %s170
    %p174 = scmp.eq.s32.totalorder %s15, 0
    %p175 = por %p173, %p174
    %p176 = scmp.ne.s32.totalorder %s168, %s170
    %p177 = scmp.eq.s32.totalorder %s20, 1
    %p178 = por %p176, %p177
    %p179 = scmp.ne.s32.totalorder %s170, %s171
    %p180 = scmp.eq.s32.totalorder %s20, 0
    %p181 = por %p179, %p180
    %p182 = scmp.ne.s32.totalorder %s170, %s171
    %p183 = scmp.eq.s32.totalorder %s21, 1
    %p184 = por %p182, %p183
    %p186 = scmp.ne.s32.totalorder %s171, %s185
    %p187 = scmp.eq.s32.totalorder %s21, 0
    %p188 = por %p186, %p187
    %s189 = ssub.s32 %s22, %s34
    %s190 = ssub.s32 %s23, %s30
    %s191 = sor.u32 %s189, %s190
    %p192 = scmp.eq.s32.totalorder %s191, 0
    %s194 = sadd.s32 %s193, 1
    %s195 = scalar_select %p192, %s193, %s194
    %p198 = pneg %p192
    %p199 = scmp.eq.s32.totalorder %s15, 1
    %p200 = por %p198, %p199
    %p201 = scmp.ne.s32.totalorder %s193, %s196
    %p202 = scmp.eq.s32.totalorder %s15, 0
    %p203 = por %p201, %p202
    %p204 = scmp.ne.s32.totalorder %s193, %s196
    %p205 = scmp.eq.s32.totalorder %s20, 1
    %p206 = por %p204, %p205
    %p207 = scmp.ne.s32.totalorder %s196, %s197
    %p208 = scmp.eq.s32.totalorder %s20, 0
    %p209 = por %p207, %p208
    %p210 = scmp.ne.s32.totalorder %s196, %s197
    %p211 = scmp.eq.s32.totalorder %s21, 1
    %p212 = por %p210, %p211
    %p214 = scmp.ne.s32.totalorder %s197, %s213
    %p215 = scmp.eq.s32.totalorder %s21, 0
    %p216 = por %p214, %p215
    %p217 = scmp.le.s32.totalorder 1, %s15
    %p218 = scmp.lt.s32.totalorder %s15, 3
    %p219 = pnand %p217, %p218
    %p220 = pneg %p219
    // Predicated region
    $region9: #{net_forward.1} parent=5 // pred_check
      _
    $region10: #{net_forward.1} parent=5 // pred_check_branch
      %222 = sbr.rel (%p219) target = $region12
    $region11: #{net_forward.1} parent=5 // pred_region
      %s223 = ssub.s32 %s15, 1
      // Predicated region
      $region13: #{net_forward.1} parent=11 // pred_check
        %p224 = pneg %p76
      $region14: #{net_forward.1} parent=11 // pred_check_branch
        %226 = sbr.rel (%p224) target = $region16
      $region15: #{net_forward.1} parent=11 // pred_region
        _
      $region16: #{net_forward.1} parent=11 // pred_fallthru
        _
      // Predicated region
      $region17: #{net_forward.1} parent=11 // pred_check
        %p227 = pneg %p97
      $region18: #{net_forward.1} parent=11 // pred_check_branch
        %229 = sbr.rel (%p227) target = $region20
      $region19: #{net_forward.1} parent=11 // pred_region
        _
      $region20: #{net_forward.1} parent=11 // pred_fallthru
        _
      // Predicated region
      $region21: #{net_forward.1} parent=11 // pred_check
        %p230 = pneg %p118
      $region22: #{net_forward.1} parent=11 // pred_check_branch
        %232 = sbr.rel (%p230) target = $region24
      $region23: #{net_forward.1} parent=11 // pred_region
        _
      $region24: #{net_forward.1} parent=11 // pred_fallthru
        _
      // Predicated region
      $region25: #{net_forward.1} parent=11 // pred_check
        %p233 = pneg %p139
      $region26: #{net_forward.1} parent=11 // pred_check_branch
        %235 = sbr.rel (%p233) target = $region28
      $region27: #{net_forward.1} parent=11 // pred_region
        _
      $region28: #{net_forward.1} parent=11 // pred_fallthru
        _
      // Predicated region
      $region29: #{net_forward.1} parent=11 // pred_check
        %p236 = pneg %p160
      $region30: #{net_forward.1} parent=11 // pred_check_branch
        %238 = sbr.rel (%p236) target = $region32
      $region31: #{net_forward.1} parent=11 // pred_region
        _
      $region32: #{net_forward.1} parent=11 // pred_fallthru
        _
      // Predicated region
      $region33: #{net_forward.1} parent=11 // pred_check
        %p239 = pneg %p181
      $region34: #{net_forward.1} parent=11 // pred_check_branch
        %241 = sbr.rel (%p239) target = $region36
      $region35: #{net_forward.1} parent=11 // pred_region
        _
      $region36: #{net_forward.1} parent=11 // pred_fallthru
        _
    $region12: #{net_forward.1} parent=5 // pred_fallthru
      _
    %p242 = scmp.lt.s32.totalorder %s15, 2
    // Predicated region
    $region37: #{net_forward.1} parent=5 // pred_check
      %p243 = pneg %p242
    $region38: #{net_forward.1} parent=5 // pred_check_branch
      %245 = sbr.rel (%p243) target = $region40
    $region39: #{net_forward.1} parent=5 // pred_region
      // Predicated region
      $region41: #{net_forward.1} parent=39 // pred_check
        %p246 = pneg %p49
      $region42: #{net_forward.1} parent=39 // pred_check_branch
        %248 = sbr.rel (%p246) target = $region44
      $region43: #{net_forward.1} parent=39 // pred_region
        %s249 = smul.u32 2, %s23
        %p250 = scmp.lt.s32.totalorder %s22, 1
        %s251 = scalar_select %p250, %s22, 1
        %p252 = scmp.lt.s32.totalorder %s249, 1
        %s253 = scalar_select %p252, %s249, 1
        %s254 = smul.addr %s251, 2
        %s255 = sadd.s32 %s253, %s254
        %s256 = smul.addr %s255, 2
        %s257 = scalar_lea.vmem %s0, %s256
        %s258 = smul.u32 2, %s23
      $region44: #{net_forward.1} parent=39 // pred_fallthru
        _
    $region40: #{net_forward.1} parent=5 // pred_fallthru
      _
    %p259 = scmp.le.s32.totalorder 1, %s15
    %p260 = scmp.lt.s32.totalorder %s15, 3
    %p261 = pnand %p259, %p260
    %p262 = pneg %p261
    // Predicated region
    $region45: #{net_forward.1} parent=5 // pred_check
      _
    $region46: #{net_forward.1} parent=5 // pred_check_branch
      %264 = sbr.rel (%p261) target = $region48
    $region47: #{net_forward.1} parent=5 // pred_region
      %s265 = ssub.s32 %s15, 1
      %s266 = smul.u32 2, %s25
      %p267 = scmp.lt.s32.totalorder %s24, 1
      %s268 = scalar_select %p267, %s24, 1
      %p269 = scmp.lt.s32.totalorder %s266, 1
      %s270 = scalar_select %p269, %s266, 1
      %s271 = smul.addr %s268, 2
      %s272 = sadd.s32 %s270, %s271
      %s273 = smul.addr %s272, 2
      %s274 = scalar_lea.vmem %s0, %s273
      %p275 = pneg %p55
      %p276 = pneg %p52
      %p277 = pneg %p76
      %p278 = pneg %p73
      %p279 = pneg %p97
      %p280 = pneg %p94
      %p281 = pneg %p118
      %p282 = pneg %p115
      %p283 = pneg %p139
      %p284 = pneg %p136
      %p285 = pneg %p160
      %p286 = pneg %p157
      %p287 = pneg %p181
      %p288 = pneg %p178
      %p289 = pneg %p209
      %p290 = pneg %p206
      %s291 = smul.u32 2, %s25
      %p292 = scmp.lt.s32.totalorder %s24, 1
      %s293 = scalar_select %p292, %s24, 1
      %p294 = scmp.lt.s32.totalorder %s291, 1
      %s295 = scalar_select %p294, %s291, 1
      %s296 = smul.addr %s293, 2
      %s297 = sadd.s32 %s295, %s296
      %s298 = scalar_lea.vmem %s7, %s297
      %s299 = smul.u32 2, %s25
      %p300 = scmp.lt.s32.totalorder %s24, 1
      %s301 = scalar_select %p300, %s24, 1
      %p302 = scmp.lt.s32.totalorder %s299, 1
      %s303 = scalar_select %p302, %s299, 1
      %s304 = smul.addr %s301, 2
      %s305 = sadd.s32 %s303, %s304
      %s306 = smul.addr %s305, 2
      %s307 = scalar_lea.vmem %s0, %s306
      %s308 = smul.u32 2, %s25
      %s309 = smul.u32 2, %s25
      %p310 = scmp.lt.s32.totalorder %s24, 1
      %s311 = scalar_select %p310, %s24, 1
      %p312 = scmp.lt.s32.totalorder %s309, 1
      %s313 = scalar_select %p312, %s309, 1
      %s314 = smul.addr %s311, 2
      %s315 = sadd.s32 %s313, %s314
      %s316 = scalar_lea.vmem %s7, %s315
      %s317 = smul.u32 2, %s25
      %v318 = vld [vmem:[%s307] sm:$0xf]
      %v319 = vld [vmem:[%s1] sm:$0x1f]
      %v320 = vld [vmem:[%s2] sm:$0x1f]
      %322 = vset.pattern.permute.xlu0 0
      %323 = vperm.xlu0 %322, %v319
      %v324 = vpop.permute.xlu0 %323
      %325 = vset.pattern.permute.xlu0 1
      %326 = vperm.xlu0 %325, %v319
      %v327 = vpop.permute.xlu0 %326
      %329 = vset.pattern.permute.xlu0 0
      %330 = vperm.xlu0 %329, %v320
      %v331 = vpop.permute.xlu0 %330
      %v333 = vlaneseq
      %v334 = vshrl.u32 %v333, 7
      %v335 = vsub.s32 0, %v334
      %v336 = vrot.slane %v318, %v335
      %v337 = vlaneseq
      %v338 = vshrl.u32 %v337, 7
      %v339 = vsub.s32 2, %v338
      %v340 = vrot.slane %v318, %v339
      %v343 = vlaneseq
      %v344 = vshrl.u32 %v343, 7
      %v345 = vsub.s32 0, %v344
      %v346 = vrot.slane %v336, %v345
      %v347 = vlaneseq
      %v348 = vshrl.u32 %v347, 7
      %v349 = vsub.s32 0, %v348
      %v350 = vrot.slane %v340, %v349
      %v353 = vcombine.low %v346, %v350
      %v355 = vunpack.c.l.s4 1983009808
      %v356 = vunpack.c.0.s8 %v355
      %v357 = vlaneseq
      %v358 = vshrl.u32 %v357, 7
      %v359 = vsub.s32 %v356, %v358
      %v360 = vrot.slane %v353, %v359
      %vm362 = vcmp.ge.f32.partialorder %v318, %v360
      %v363 = vsel %vm362, 1, 0
      %vm364 = vcmp.eq.s32.totalorder %v363, 1
      %v366 = vunpack.c.l.s4 269488144
      %v367 = vunpack.c.0.s8 %v366
      %v368 = vlaneseq
      %v369 = vshrl.u32 %v368, 7
      %v370 = vsub.s32 %v367, %v369
      %v371 = vrot.slane %v324, %v370
      %v373 = vunpack.c.l.s4 842150450
      %v374 = vunpack.c.0.s8 %v373
      %v375 = vlaneseq
      %v376 = vshrl.u32 %v375, 7
      %v377 = vsub.s32 %v374, %v376
      %v378 = vrot.slane %v324, %v377
      %v380 = vunpack.c.l.s4 1414812756
      %v381 = vunpack.c.0.s8 %v380
      %v382 = vlaneseq
      %v383 = vshrl.u32 %v382, 7
      %v384 = vsub.s32 %v381, %v383
      %v385 = vrot.slane %v324, %v384
      %v386 = vrot.slane %v371, 1
      %v387 = vrot.slane %v378, 1
      %v393 = vsel %vm364, %v371, 0.0
      %v394 = vsel %vm364, %v386, 0.0
      %v395 = vsel %vm364, %v378, 0.0
      %v396 = vsel %vm364, %v387, 0.0
      %v397 = vsel %vm364, %v385, 0.0
      %v398 = vadd.f32 %v393, 0.0
      %v399 = vadd.f32 %v394, 0.0
      %v400 = vadd.f32 %v395, 0.0
      %v401 = vadd.f32 %v396, 0.0
      %v402 = vadd.f32 %v397, 0.0
      %v404 = vunpack.c.l.s4 269488144
      %v405 = vunpack.c.0.s8 %v404
      %v406 = vlaneseq
      %v407 = vshrl.u32 %v406, 7
      %v408 = vsub.s32 %v405, %v407
      %v409 = vrot.slane %v327, %v408
      %v411 = vunpack.c.l.s4 842150450
      %v412 = vunpack.c.0.s8 %v411
      %v413 = vlaneseq
      %v414 = vshrl.u32 %v413, 7
      %v415 = vsub.s32 %v412, %v414
      %v416 = vrot.slane %v327, %v415
      %v418 = vunpack.c.l.s4 1414812756
      %v419 = vunpack.c.0.s8 %v418
      %v420 = vlaneseq
      %v421 = vshrl.u32 %v420, 7
      %v422 = vsub.s32 %v419, %v421
      %v423 = vrot.slane %v327, %v422
      %v424 = vrot.slane %v409, 7
      %v425 = vrot.slane %v416, 7
      %v426 = vrot.slane %v423, 7
      %v432 = vsel %vm364, %v424, 0.0
      %v433 = vsel %vm364, %v409, 0.0
      %v434 = vsel %vm364, %v425, 0.0
      %v435 = vsel %vm364, %v416, 0.0
      %v436 = vsel %vm364, %v426, 0.0
      %v442 = vrot.slane %v432, 7
      %v443 = vrot.slane %v442, 2
      %v444 = vrot.slane %v433, 7
      %v445 = vrot.slane %v444, 2
      %v446 = vrot.slane %v434, 7
      %v447 = vrot.slane %v446, 2
      %v448 = vrot.slane %v435, 7
      %v449 = vrot.slane %v448, 2
      %v450 = vrot.slane %v436, 7
      %v451 = vrot.slane %v450, 2
      %v457 = vadd.f32 %v398, %v443
      %v458 = vadd.f32 %v399, %v445
      %v459 = vadd.f32 %v400, %v447
      %v460 = vadd.f32 %v401, %v449
      %v461 = vadd.f32 %v402, %v451
      %v463 = vunpack.c.l.s4 269488144
      %v464 = vunpack.c.0.s8 %v463
      %v465 = vlaneseq
      %v466 = vshrl.u32 %v465, 7
      %v467 = vsub.s32 %v464, %v466
      %v468 = vrot.slane %v331, %v467
      %v470 = vunpack.c.l.s4 842150450
      %v471 = vunpack.c.0.s8 %v470
      %v472 = vlaneseq
      %v473 = vshrl.u32 %v472, 7
      %v474 = vsub.s32 %v471, %v473
      %v475 = vrot.slane %v331, %v474
      %v477 = vunpack.c.l.s4 1414812756
      %v478 = vunpack.c.0.s8 %v477
      %v479 = vlaneseq
      %v480 = vshrl.u32 %v479, 7
      %v481 = vsub.s32 %v478, %v480
      %v482 = vrot.slane %v331, %v481
      %v483 = vrot.slane %v468, 1
      %v484 = vrot.slane %v475, 1
      %vm490 = vcmp.ge.f32.partialorder %v457, %v468
      %vm491 = vcmp.ge.f32.partialorder %v458, %v483
      %vm492 = vcmp.ge.f32.partialorder %v459, %v475
      %vm493 = vcmp.ge.f32.partialorder %v460, %v484
      %vm494 = vcmp.ge.f32.partialorder %v461, %v482
      %v495 = vcombine.high %v346, %v350
      %v497 = vunpack.c.l.s4 1983009808
      %v498 = vunpack.c.0.s8 %v497
      %v499 = vlaneseq
      %v500 = vshrl.u32 %v499, 7
      %v501 = vsub.s32 %v498, %v500
      %v502 = vrot.slane %v495, %v501
      %v503 = vcombine.high %v360, %v360
      %v504 = vrot.slane %v360, 1
      %v505 = vrot.slane %v503, 1
      %v510 = vsel %vm490, %v360, -inf
      %v511 = vsel %vm491, %v504, -inf
      %v512 = vsel %vm492, %v503, -inf
      %v513 = vsel %vm493, %v505, -inf
      %v514 = vsel %vm494, %v502, -inf
      %v515 = vlaneseq
      %v516 = vshrl.u32 %v515, 7
      %v517 = vsub.s32 1, %v516
      %v518 = vrot.slane %v318, %v517
      %v519 = vlaneseq
      %v520 = vshrl.u32 %v519, 7
      %v521 = vsub.s32 3, %v520
      %v522 = vrot.slane %v318, %v521
      %v525 = vlaneseq
      %v526 = vshrl.u32 %v525, 7
      %v527 = vsub.s32 1, %v526
      %v528 = vrot.slane %v518, %v527
      %v529 = vlaneseq
      %v530 = vshrl.u32 %v529, 7
      %v531 = vsub.s32 1, %v530
      %v532 = vrot.slane %v522, %v531
      %v535 = vcombine.low %v528, %v532
      %v537 = vunpack.c.l.s4 1983009808
      %v538 = vunpack.c.0.s8 %v537
      %v539 = vlaneseq
      %v540 = vshrl.u32 %v539, 7
      %v541 = vsub.s32 %v538, %v540
      %v542 = vrot.slane %v535, %v541
      %vm544 = vcmp.ge.f32.partialorder %v318, %v542
      %v545 = vsel %vm544, 1, 0
      %vm546 = vcmp.eq.s32.totalorder %v545, 1
      %v547 = vsel %vm546, %v371, 0.0
      %v548 = vsel %vm546, %v386, 0.0
      %v549 = vsel %vm546, %v378, 0.0
      %v550 = vsel %vm546, %v387, 0.0
      %v551 = vsel %vm546, %v385, 0.0
      %v552 = vadd.f32 %v547, 0.0
      %v553 = vadd.f32 %v548, 0.0
      %v554 = vadd.f32 %v549, 0.0
      %v555 = vadd.f32 %v550, 0.0
      %v556 = vadd.f32 %v551, 0.0
      %v557 = vsel %vm546, %v424, 0.0
      %v558 = vsel %vm546, %v409, 0.0
      %v559 = vsel %vm546, %v425, 0.0
      %v560 = vsel %vm546, %v416, 0.0
      %v561 = vsel %vm546, %v426, 0.0
      %v567 = vrot.slane %v557, 7
      %v568 = vrot.slane %v567, 2
      %v569 = vrot.slane %v558, 7
      %v570 = vrot.slane %v569, 2
      %v571 = vrot.slane %v559, 7
      %v572 = vrot.slane %v571, 2
      %v573 = vrot.slane %v560, 7
      %v574 = vrot.slane %v573, 2
      %v575 = vrot.slane %v561, 7
      %v576 = vrot.slane %v575, 2
      %v582 = vadd.f32 %v552, %v568
      %v583 = vadd.f32 %v553, %v570
      %v584 = vadd.f32 %v554, %v572
      %v585 = vadd.f32 %v555, %v574
      %v586 = vadd.f32 %v556, %v576
      %vm587 = vcmp.ge.f32.partialorder %v582, %v468
      %vm588 = vcmp.ge.f32.partialorder %v583, %v483
      %vm589 = vcmp.ge.f32.partialorder %v584, %v475
      %vm590 = vcmp.ge.f32.partialorder %v585, %v484
      %vm591 = vcmp.ge.f32.partialorder %v586, %v482
      %v592 = vcombine.high %v528, %v532
      %v594 = vunpack.c.l.s4 1983009808
      %v595 = vunpack.c.0.s8 %v594
      %v596 = vlaneseq
      %v597 = vshrl.u32 %v596, 7
      %v598 = vsub.s32 %v595, %v597
      %v599 = vrot.slane %v592, %v598
      %v600 = vcombine.high %v542, %v542
      %v601 = vrot.slane %v542, 1
      %v602 = vrot.slane %v600, 1
      %v607 = vmax.f32 %v510, %v542
      %v608 = vmax.f32 %v511, %v601
      %v609 = vmax.f32 %v512, %v600
      %v610 = vmax.f32 %v513, %v602
      %v611 = vmax.f32 %v514, %v599
      %v612 = vsel %vm587, %v607, %v510
      %v613 = vsel %vm588, %v608, %v511
      %v614 = vsel %vm589, %v609, %v512
      %v615 = vsel %vm590, %v610, %v513
      %v616 = vsel %vm591, %v611, %v514
      %v617 = vld [vmem:[%s3] sm:$0x1f]
      %v618 = vld [vmem:[%s4] sm:$0x1f]
      %620 = vset.pattern.permute.xlu0 0
      %621 = vperm.xlu0 %620, %v617
      %v622 = vpop.permute.xlu0 %621
      %623 = vset.pattern.permute.xlu0 1
      %624 = vperm.xlu0 %623, %v617
      %v625 = vpop.permute.xlu0 %624
      %626 = vset.pattern.permute.xlu0 2
      %627 = vperm.xlu0 %626, %v617
      %v628 = vpop.permute.xlu0 %627
      %629 = vset.pattern.permute.xlu0 3
      %630 = vperm.xlu0 %629, %v617
      %v631 = vpop.permute.xlu0 %630
      %632 = vset.pattern.permute.xlu0 4
      %633 = vperm.xlu0 %632, %v617
      %v634 = vpop.permute.xlu0 %633
      %636 = vset.pattern.permute.xlu0 0
      %637 = vperm.xlu0 %636, %v618
      %v638 = vpop.permute.xlu0 %637
      %v640 = vlaneseq
      %v641 = vshrl.u32 %v640, 7
      %v642 = vsub.s32 0, %v641
      %v643 = vrot.slane %v612, %v642
      %v644 = vlaneseq
      %v645 = vshrl.u32 %v644, 7
      %v646 = vsub.s32 2, %v645
      %v647 = vrot.slane %v612, %v646
      %v650 = vlaneseq
      %v651 = vshrl.u32 %v650, 7
      %v652 = vsub.s32 0, %v651
      %v653 = vrot.slane %v643, %v652
      %v654 = vlaneseq
      %v655 = vshrl.u32 %v654, 7
      %v656 = vsub.s32 0, %v655
      %v657 = vrot.slane %v647, %v656
      %v660 = vcombine.low %v653, %v657
      %v661 = vcombine.high %v653, %v657
      %v663 = vunpack.c.l.s4 1983009808
      %v664 = vunpack.c.0.s8 %v663
      %v665 = vlaneseq
      %v666 = vshrl.u32 %v665, 7
      %v667 = vsub.s32 %v664, %v666
      %v668 = vrot.slane %v660, %v667
      %v670 = vunpack.c.l.s4 1983009808
      %v671 = vunpack.c.0.s8 %v670
      %v672 = vlaneseq
      %v673 = vshrl.u32 %v672, 7
      %v674 = vsub.s32 %v671, %v673
      %v675 = vrot.slane %v661, %v674
      %v676 = vcombine.high %v668, %v668
      %v677 = vrot.slane %v668, 1
      %v678 = vrot.slane %v676, 1
      %vm684 = vcmp.ge.f32.partialorder %v612, %v668
      %vm685 = vcmp.ge.f32.partialorder %v613, %v677
      %vm686 = vcmp.ge.f32.partialorder %v614, %v676
      %vm687 = vcmp.ge.f32.partialorder %v615, %v678
      %vm688 = vcmp.ge.f32.partialorder %v616, %v675
      %v689 = vsel %vm684, 1, 0
      %vm690 = vcmp.eq.s32.totalorder %v689, 1
      %v692 = vunpack.c.l.s4 269488144
      %v693 = vunpack.c.0.s8 %v692
      %v694 = vlaneseq
      %v695 = vshrl.u32 %v694, 7
      %v696 = vsub.s32 %v693, %v695
      %v697 = vrot.slane %v622, %v696
      %v699 = vunpack.c.l.s4 842150450
      %v700 = vunpack.c.0.s8 %v699
      %v701 = vlaneseq
      %v702 = vshrl.u32 %v701, 7
      %v703 = vsub.s32 %v700, %v702
      %v704 = vrot.slane %v622, %v703
      %v706 = vunpack.c.l.s4 1414812756
      %v707 = vunpack.c.0.s8 %v706
      %v708 = vlaneseq
      %v709 = vshrl.u32 %v708, 7
      %v710 = vsub.s32 %v707, %v709
      %v711 = vrot.slane %v622, %v710
      %v712 = vrot.slane %v697, 1
      %v713 = vrot.slane %v704, 1
      %v719 = vsel %vm690, %v697, 0.0
      %v720 = vsel %vm690, %v712, 0.0
      %v721 = vsel %vm690, %v704, 0.0
      %v722 = vsel %vm690, %v713, 0.0
      %v723 = vsel %vm690, %v711, 0.0
      %v724 = vadd.f32 %v719, 0.0
      %v725 = vadd.f32 %v720, 0.0
      %v726 = vadd.f32 %v721, 0.0
      %v727 = vadd.f32 %v722, 0.0
      %v728 = vadd.f32 %v723, 0.0
      %v729 = vsel %vm685, 1, 0
      %vm730 = vcmp.eq.s32.totalorder %v729, 1
      %v732 = vunpack.c.l.s4 269488144
      %v733 = vunpack.c.0.s8 %v732
      %v734 = vlaneseq
      %v735 = vshrl.u32 %v734, 7
      %v736 = vsub.s32 %v733, %v735
      %v737 = vrot.slane %v625, %v736
      %v739 = vunpack.c.l.s4 842150450
      %v740 = vunpack.c.0.s8 %v739
      %v741 = vlaneseq
      %v742 = vshrl.u32 %v741, 7
      %v743 = vsub.s32 %v740, %v742
      %v744 = vrot.slane %v625, %v743
      %v746 = vunpack.c.l.s4 1414812756
      %v747 = vunpack.c.0.s8 %v746
      %v748 = vlaneseq
      %v749 = vshrl.u32 %v748, 7
      %v750 = vsub.s32 %v747, %v749
      %v751 = vrot.slane %v625, %v750
      %v752 = vrot.slane %v737, 1
      %v753 = vrot.slane %v744, 1
      %v759 = vsel %vm730, %v737, 0.0
      %v760 = vsel %vm730, %v752, 0.0
      %v761 = vsel %vm730, %v744, 0.0
      %v762 = vsel %vm730, %v753, 0.0
      %v763 = vsel %vm730, %v751, 0.0
      %v764 = vadd.f32 %v724, %v759
      %v765 = vadd.f32 %v725, %v760
      %v766 = vadd.f32 %v726, %v761
      %v767 = vadd.f32 %v727, %v762
      %v768 = vadd.f32 %v728, %v763
      %v769 = vsel %vm686, 1, 0
      %vm770 = vcmp.eq.s32.totalorder %v769, 1
      %v772 = vunpack.c.l.s4 269488144
      %v773 = vunpack.c.0.s8 %v772
      %v774 = vlaneseq
      %v775 = vshrl.u32 %v774, 7
      %v776 = vsub.s32 %v773, %v775
      %v777 = vrot.slane %v628, %v776
      %v779 = vunpack.c.l.s4 842150450
      %v780 = vunpack.c.0.s8 %v779
      %v781 = vlaneseq
      %v782 = vshrl.u32 %v781, 7
      %v783 = vsub.s32 %v780, %v782
      %v784 = vrot.slane %v628, %v783
      %v786 = vunpack.c.l.s4 1414812756
      %v787 = vunpack.c.0.s8 %v786
      %v788 = vlaneseq
      %v789 = vshrl.u32 %v788, 7
      %v790 = vsub.s32 %v787, %v789
      %v791 = vrot.slane %v628, %v790
      %v792 = vrot.slane %v777, 1
      %v793 = vrot.slane %v784, 1
      %v799 = vsel %vm770, %v777, 0.0
      %v800 = vsel %vm770, %v792, 0.0
      %v801 = vsel %vm770, %v784, 0.0
      %v802 = vsel %vm770, %v793, 0.0
      %v803 = vsel %vm770, %v791, 0.0
      %v804 = vadd.f32 %v764, %v799
      %v805 = vadd.f32 %v765, %v800
      %v806 = vadd.f32 %v766, %v801
      %v807 = vadd.f32 %v767, %v802
      %v808 = vadd.f32 %v768, %v803
      %v809 = vsel %vm687, 1, 0
      %vm810 = vcmp.eq.s32.totalorder %v809, 1
      %v812 = vunpack.c.l.s4 269488144
      %v813 = vunpack.c.0.s8 %v812
      %v814 = vlaneseq
      %v815 = vshrl.u32 %v814, 7
      %v816 = vsub.s32 %v813, %v815
      %v817 = vrot.slane %v631, %v816
      %v819 = vunpack.c.l.s4 842150450
      %v820 = vunpack.c.0.s8 %v819
      %v821 = vlaneseq
      %v822 = vshrl.u32 %v821, 7
      %v823 = vsub.s32 %v820, %v822
      %v824 = vrot.slane %v631, %v823
      %v826 = vunpack.c.l.s4 1414812756
      %v827 = vunpack.c.0.s8 %v826
      %v828 = vlaneseq
      %v829 = vshrl.u32 %v828, 7
      %v830 = vsub.s32 %v827, %v829
      %v831 = vrot.slane %v631, %v830
      %v832 = vrot.slane %v817, 1
      %v833 = vrot.slane %v824, 1
      %v839 = vsel %vm810, %v817, 0.0
      %v840 = vsel %vm810, %v832, 0.0
      %v841 = vsel %vm810, %v824, 0.0
      %v842 = vsel %vm810, %v833, 0.0
      %v843 = vsel %vm810, %v831, 0.0
      %v844 = vadd.f32 %v804, %v839
      %v845 = vadd.f32 %v805, %v840
      %v846 = vadd.f32 %v806, %v841
      %v847 = vadd.f32 %v807, %v842
      %v848 = vadd.f32 %v808, %v843
      %v849 = vsel %vm688, 1, 0
      %vm850 = vcmp.eq.s32.totalorder %v849, 1
      %v852 = vunpack.c.l.s4 269488144
      %v853 = vunpack.c.0.s8 %v852
      %v854 = vlaneseq
      %v855 = vshrl.u32 %v854, 7
      %v856 = vsub.s32 %v853, %v855
      %v857 = vrot.slane %v634, %v856
      %v859 = vunpack.c.l.s4 842150450
      %v860 = vunpack.c.0.s8 %v859
      %v861 = vlaneseq
      %v862 = vshrl.u32 %v861, 7
      %v863 = vsub.s32 %v860, %v862
      %v864 = vrot.slane %v634, %v863
      %v866 = vunpack.c.l.s4 1414812756
      %v867 = vunpack.c.0.s8 %v866
      %v868 = vlaneseq
      %v869 = vshrl.u32 %v868, 7
      %v870 = vsub.s32 %v867, %v869
      %v871 = vrot.slane %v634, %v870
      %v872 = vrot.slane %v857, 1
      %v873 = vrot.slane %v864, 1
      %v879 = vsel %vm850, %v857, 0.0
      %v880 = vsel %vm850, %v872, 0.0
      %v881 = vsel %vm850, %v864, 0.0
      %v882 = vsel %vm850, %v873, 0.0
      %v883 = vsel %vm850, %v871, 0.0
      %v884 = vadd.f32 %v844, %v879
      %v885 = vadd.f32 %v845, %v880
      %v886 = vadd.f32 %v846, %v881
      %v887 = vadd.f32 %v847, %v882
      %v888 = vadd.f32 %v848, %v883
      %v890 = vunpack.c.l.s4 269488144
      %v891 = vunpack.c.0.s8 %v890
      %v892 = vlaneseq
      %v893 = vshrl.u32 %v892, 7
      %v894 = vsub.s32 %v891, %v893
      %v895 = vrot.slane %v638, %v894
      %v897 = vunpack.c.l.s4 842150450
      %v898 = vunpack.c.0.s8 %v897
      %v899 = vlaneseq
      %v900 = vshrl.u32 %v899, 7
      %v901 = vsub.s32 %v898, %v900
      %v902 = vrot.slane %v638, %v901
      %v904 = vunpack.c.l.s4 1414812756
      %v905 = vunpack.c.0.s8 %v904
      %v906 = vlaneseq
      %v907 = vshrl.u32 %v906, 7
      %v908 = vsub.s32 %v905, %v907
      %v909 = vrot.slane %v638, %v908
      %v910 = vrot.slane %v895, 1
      %v911 = vrot.slane %v902, 1
      %vm917 = vcmp.ge.f32.partialorder %v884, %v895
      %vm918 = vcmp.ge.f32.partialorder %v885, %v910
      %vm919 = vcmp.ge.f32.partialorder %v886, %v902
      %vm920 = vcmp.ge.f32.partialorder %v887, %v911
      %vm921 = vcmp.ge.f32.partialorder %v888, %v909
      %v922 = vsel %vm917, %v668, -inf
      %v923 = vsel %vm918, %v677, -inf
      %v924 = vsel %vm919, %v676, -inf
      %v925 = vsel %vm920, %v678, -inf
      %v926 = vsel %vm921, %v675, -inf
      %v928 = vlaneseq
      %v929 = vshrl.u32 %v928, 7
      %v930 = vsub.s32 0, %v929
      %v931 = vrot.slane %v613, %v930
      %v932 = vlaneseq
      %v933 = vshrl.u32 %v932, 7
      %v934 = vsub.s32 2, %v933
      %v935 = vrot.slane %v613, %v934
      %v938 = vlaneseq
      %v939 = vshrl.u32 %v938, 7
      %v940 = vsub.s32 0, %v939
      %v941 = vrot.slane %v931, %v940
      %v942 = vlaneseq
      %v943 = vshrl.u32 %v942, 7
      %v944 = vsub.s32 0, %v943
      %v945 = vrot.slane %v935, %v944
      %v948 = vcombine.low %v941, %v945
      %v949 = vcombine.high %v941, %v945
      %v951 = vunpack.c.l.s4 1983009808
      %v952 = vunpack.c.0.s8 %v951
      %v953 = vlaneseq
      %v954 = vshrl.u32 %v953, 7
      %v955 = vsub.s32 %v952, %v954
      %v956 = vrot.slane %v948, %v955
      %v958 = vunpack.c.l.s4 1983009808
      %v959 = vunpack.c.0.s8 %v958
      %v960 = vlaneseq
      %v961 = vshrl.u32 %v960, 7
      %v962 = vsub.s32 %v959, %v961
      %v963 = vrot.slane %v949, %v962
      %v964 = vcombine.high %v956, %v956
      %v965 = vrot.slane %v956, 1
      %v966 = vrot.slane %v964, 1
      %vm972 = vcmp.ge.f32.partialorder %v612, %v956
      %vm973 = vcmp.ge.f32.partialorder %v613, %v965
      %vm974 = vcmp.ge.f32.partialorder %v614, %v964
      %vm975 = vcmp.ge.f32.partialorder %v615, %v966
      %vm976 = vcmp.ge.f32.partialorder %v616, %v963
      %v977 = vsel %vm972, 1, 0
      %vm978 = vcmp.eq.s32.totalorder %v977, 1
      %v979 = vsel %vm978, %v697, 0.0
      %v980 = vsel %vm978, %v712, 0.0
      %v981 = vsel %vm978, %v704, 0.0
      %v982 = vsel %vm978, %v713, 0.0
      %v983 = vsel %vm978, %v711, 0.0
      %v984 = vadd.f32 %v979, 0.0
      %v985 = vadd.f32 %v980, 0.0
      %v986 = vadd.f32 %v981, 0.0
      %v987 = vadd.f32 %v982, 0.0
      %v988 = vadd.f32 %v983, 0.0
      %v989 = vsel %vm973, 1, 0
      %vm990 = vcmp.eq.s32.totalorder %v989, 1
      %v991 = vsel %vm990, %v737, 0.0
      %v992 = vsel %vm990, %v752, 0.0
      %v993 = vsel %vm990, %v744, 0.0
      %v994 = vsel %vm990, %v753, 0.0
      %v995 = vsel %vm990, %v751, 0.0
      %v996 = vadd.f32 %v984, %v991
      %v997 = vadd.f32 %v985, %v992
      %v998 = vadd.f32 %v986, %v993
      %v999 = vadd.f32 %v987, %v994
      %v1000 = vadd.f32 %v988, %v995
      %v1001 = vsel %vm974, 1, 0
      %vm1002 = vcmp.eq.s32.totalorder %v1001, 1
      %v1003 = vsel %vm1002, %v777, 0.0
      %v1004 = vsel %vm1002, %v792, 0.0
      %v1005 = vsel %vm1002, %v784, 0.0
      %v1006 = vsel %vm1002, %v793, 0.0
      %v1007 = vsel %vm1002, %v791, 0.0
      %v1008 = vadd.f32 %v996, %v1003
      %v1009 = vadd.f32 %v997, %v1004
      %v1010 = vadd.f32 %v998, %v1005
      %v1011 = vadd.f32 %v999, %v1006
      %v1012 = vadd.f32 %v1000, %v1007
      %v1013 = vsel %vm975, 1, 0
      %vm1014 = vcmp.eq.s32.totalorder %v1013, 1
      %v1015 = vsel %vm1014, %v817, 0.0
      %v1016 = vsel %vm1014, %v832, 0.0
      %v1017 = vsel %vm1014, %v824, 0.0
      %v1018 = vsel %vm1014, %v833, 0.0
      %v1019 = vsel %vm1014, %v831, 0.0
      %v1020 = vadd.f32 %v1008, %v1015
      %v1021 = vadd.f32 %v1009, %v1016
      %v1022 = vadd.f32 %v1010, %v1017
      %v1023 = vadd.f32 %v1011, %v1018
      %v1024 = vadd.f32 %v1012, %v1019
      %v1025 = vsel %vm976, 1, 0
      %vm1026 = vcmp.eq.s32.totalorder %v1025, 1
      %v1027 = vsel %vm1026, %v857, 0.0
      %v1028 = vsel %vm1026, %v872, 0.0
      %v1029 = vsel %vm1026, %v864, 0.0
      %v1030 = vsel %vm1026, %v873, 0.0
      %v1031 = vsel %vm1026, %v871, 0.0
      %v1032 = vadd.f32 %v1020, %v1027
      %v1033 = vadd.f32 %v1021, %v1028
      %v1034 = vadd.f32 %v1022, %v1029
      %v1035 = vadd.f32 %v1023, %v1030
      %v1036 = vadd.f32 %v1024, %v1031
      %vm1037 = vcmp.ge.f32.partialorder %v1032, %v895
      %vm1038 = vcmp.ge.f32.partialorder %v1033, %v910
      %vm1039 = vcmp.ge.f32.partialorder %v1034, %v902
      %vm1040 = vcmp.ge.f32.partialorder %v1035, %v911
      %vm1041 = vcmp.ge.f32.partialorder %v1036, %v909
      %v1042 = vmax.f32 %v922, %v956
      %v1043 = vmax.f32 %v923, %v965
      %v1044 = vmax.f32 %v924, %v964
      %v1045 = vmax.f32 %v925, %v966
      %v1046 = vmax.f32 %v926, %v963
      %v1047 = vsel %vm1037, %v1042, %v922
      %v1048 = vsel %vm1038, %v1043, %v923
      %v1049 = vsel %vm1039, %v1044, %v924
      %v1050 = vsel %vm1040, %v1045, %v925
      %v1051 = vsel %vm1041, %v1046, %v926
      %v1053 = vlaneseq
      %v1054 = vshrl.u32 %v1053, 7
      %v1055 = vsub.s32 0, %v1054
      %v1056 = vrot.slane %v614, %v1055
      %v1057 = vlaneseq
      %v1058 = vshrl.u32 %v1057, 7
      %v1059 = vsub.s32 2, %v1058
      %v1060 = vrot.slane %v614, %v1059
      %v1063 = vlaneseq
      %v1064 = vshrl.u32 %v1063, 7
      %v1065 = vsub.s32 0, %v1064
      %v1066 = vrot.slane %v1056, %v1065
      %v1067 = vlaneseq
      %v1068 = vshrl.u32 %v1067, 7
      %v1069 = vsub.s32 0, %v1068
      %v1070 = vrot.slane %v1060, %v1069
      %v1073 = vcombine.low %v1066, %v1070
      %v1074 = vcombine.high %v1066, %v1070
      %v1076 = vunpack.c.l.s4 1983009808
      %v1077 = vunpack.c.0.s8 %v1076
      %v1078 = vlaneseq
      %v1079 = vshrl.u32 %v1078, 7
      %v1080 = vsub.s32 %v1077, %v1079
      %v1081 = vrot.slane %v1073, %v1080
      %v1083 = vunpack.c.l.s4 1983009808
      %v1084 = vunpack.c.0.s8 %v1083
      %v1085 = vlaneseq
      %v1086 = vshrl.u32 %v1085, 7
      %v1087 = vsub.s32 %v1084, %v1086
      %v1088 = vrot.slane %v1074, %v1087
      %v1089 = vcombine.high %v1081, %v1081
      %v1090 = vrot.slane %v1081, 1
      %v1091 = vrot.slane %v1089, 1
      %vm1097 = vcmp.ge.f32.partialorder %v612, %v1081
      %vm1098 = vcmp.ge.f32.partialorder %v613, %v1090
      %vm1099 = vcmp.ge.f32.partialorder %v614, %v1089
      %vm1100 = vcmp.ge.f32.partialorder %v615, %v1091
      %vm1101 = vcmp.ge.f32.partialorder %v616, %v1088
      %v1102 = vsel %vm1097, 1, 0
      %vm1103 = vcmp.eq.s32.totalorder %v1102, 1
      %v1104 = vsel %vm1103, %v697, 0.0
      %v1105 = vsel %vm1103, %v712, 0.0
      %v1106 = vsel %vm1103, %v704, 0.0
      %v1107 = vsel %vm1103, %v713, 0.0
      %v1108 = vsel %vm1103, %v711, 0.0
      %v1109 = vadd.f32 %v1104, 0.0
      %v1110 = vadd.f32 %v1105, 0.0
      %v1111 = vadd.f32 %v1106, 0.0
      %v1112 = vadd.f32 %v1107, 0.0
      %v1113 = vadd.f32 %v1108, 0.0
      %v1114 = vsel %vm1098, 1, 0
      %vm1115 = vcmp.eq.s32.totalorder %v1114, 1
      %v1116 = vsel %vm1115, %v737, 0.0
      %v1117 = vsel %vm1115, %v752, 0.0
      %v1118 = vsel %vm1115, %v744, 0.0
      %v1119 = vsel %vm1115, %v753, 0.0
      %v1120 = vsel %vm1115, %v751, 0.0
      %v1121 = vadd.f32 %v1109, %v1116
      %v1122 = vadd.f32 %v1110, %v1117
      %v1123 = vadd.f32 %v1111, %v1118
      %v1124 = vadd.f32 %v1112, %v1119
      %v1125 = vadd.f32 %v1113, %v1120
      %v1126 = vsel %vm1099, 1, 0
      %vm1127 = vcmp.eq.s32.totalorder %v1126, 1
      %v1128 = vsel %vm1127, %v777, 0.0
      %v1129 = vsel %vm1127, %v792, 0.0
      %v1130 = vsel %vm1127, %v784, 0.0
      %v1131 = vsel %vm1127, %v793, 0.0
      %v1132 = vsel %vm1127, %v791, 0.0
      %v1133 = vadd.f32 %v1121, %v1128
      %v1134 = vadd.f32 %v1122, %v1129
      %v1135 = vadd.f32 %v1123, %v1130
      %v1136 = vadd.f32 %v1124, %v1131
      %v1137 = vadd.f32 %v1125, %v1132
      %v1138 = vsel %vm1100, 1, 0
      %vm1139 = vcmp.eq.s32.totalorder %v1138, 1
      %v1140 = vsel %vm1139, %v817, 0.0
      %v1141 = vsel %vm1139, %v832, 0.0
      %v1142 = vsel %vm1139, %v824, 0.0
      %v1143 = vsel %vm1139, %v833, 0.0
      %v1144 = vsel %vm1139, %v831, 0.0
      %v1145 = vadd.f32 %v1133, %v1140
      %v1146 = vadd.f32 %v1134, %v1141
      %v1147 = vadd.f32 %v1135, %v1142
      %v1148 = vadd.f32 %v1136, %v1143
      %v1149 = vadd.f32 %v1137, %v1144
      %v1150 = vsel %vm1101, 1, 0
      %vm1151 = vcmp.eq.s32.totalorder %v1150, 1
      %v1152 = vsel %vm1151, %v857, 0.0
      %v1153 = vsel %vm1151, %v872, 0.0
      %v1154 = vsel %vm1151, %v864, 0.0
      %v1155 = vsel %vm1151, %v873, 0.0
      %v1156 = vsel %vm1151, %v871, 0.0
      %v1157 = vadd.f32 %v1145, %v1152
      %v1158 = vadd.f32 %v1146, %v1153
      %v1159 = vadd.f32 %v1147, %v1154
      %v1160 = vadd.f32 %v1148, %v1155
      %v1161 = vadd.f32 %v1149, %v1156
      %vm1162 = vcmp.ge.f32.partialorder %v1157, %v895
      %vm1163 = vcmp.ge.f32.partialorder %v1158, %v910
      %vm1164 = vcmp.ge.f32.partialorder %v1159, %v902
      %vm1165 = vcmp.ge.f32.partialorder %v1160, %v911
      %vm1166 = vcmp.ge.f32.partialorder %v1161, %v909
      %v1167 = vmax.f32 %v1047, %v1081
      %v1168 = vmax.f32 %v1048, %v1090
      %v1169 = vmax.f32 %v1049, %v1089
      %v1170 = vmax.f32 %v1050, %v1091
      %v1171 = vmax.f32 %v1051, %v1088
      %v1172 = vsel %vm1162, %v1167, %v1047
      %v1173 = vsel %vm1163, %v1168, %v1048
      %v1174 = vsel %vm1164, %v1169, %v1049
      %v1175 = vsel %vm1165, %v1170, %v1050
      %v1176 = vsel %vm1166, %v1171, %v1051
      %v1178 = vlaneseq
      %v1179 = vshrl.u32 %v1178, 7
      %v1180 = vsub.s32 0, %v1179
      %v1181 = vrot.slane %v615, %v1180
      %v1182 = vlaneseq
      %v1183 = vshrl.u32 %v1182, 7
      %v1184 = vsub.s32 2, %v1183
      %v1185 = vrot.slane %v615, %v1184
      %v1188 = vlaneseq
      %v1189 = vshrl.u32 %v1188, 7
      %v1190 = vsub.s32 0, %v1189
      %v1191 = vrot.slane %v1181, %v1190
      %v1192 = vlaneseq
      %v1193 = vshrl.u32 %v1192, 7
      %v1194 = vsub.s32 0, %v1193
      %v1195 = vrot.slane %v1185, %v1194
      %v1198 = vcombine.low %v1191, %v1195
      %v1199 = vcombine.high %v1191, %v1195
      %v1201 = vunpack.c.l.s4 1983009808
      %v1202 = vunpack.c.0.s8 %v1201
      %v1203 = vlaneseq
      %v1204 = vshrl.u32 %v1203, 7
      %v1205 = vsub.s32 %v1202, %v1204
      %v1206 = vrot.slane %v1198, %v1205
      %v1208 = vunpack.c.l.s4 1983009808
      %v1209 = vunpack.c.0.s8 %v1208
      %v1210 = vlaneseq
      %v1211 = vshrl.u32 %v1210, 7
      %v1212 = vsub.s32 %v1209, %v1211
      %v1213 = vrot.slane %v1199, %v1212
      %v1214 = vcombine.high %v1206, %v1206
      %v1215 = vrot.slane %v1206, 1
      %v1216 = vrot.slane %v1214, 1
      %vm1222 = vcmp.ge.f32.partialorder %v612, %v1206
      %vm1223 = vcmp.ge.f32.partialorder %v613, %v1215
      %vm1224 = vcmp.ge.f32.partialorder %v614, %v1214
      %vm1225 = vcmp.ge.f32.partialorder %v615, %v1216
      %vm1226 = vcmp.ge.f32.partialorder %v616, %v1213
      %v1227 = vsel %vm1222, 1, 0
      %vm1228 = vcmp.eq.s32.totalorder %v1227, 1
      %v1229 = vsel %vm1228, %v697, 0.0
      %v1230 = vsel %vm1228, %v712, 0.0
      %v1231 = vsel %vm1228, %v704, 0.0
      %v1232 = vsel %vm1228, %v713, 0.0
      %v1233 = vsel %vm1228, %v711, 0.0
      %v1234 = vadd.f32 %v1229, 0.0
      %v1235 = vadd.f32 %v1230, 0.0
      %v1236 = vadd.f32 %v1231, 0.0
      %v1237 = vadd.f32 %v1232, 0.0
      %v1238 = vadd.f32 %v1233, 0.0
      %v1239 = vsel %vm1223, 1, 0
      %vm1240 = vcmp.eq.s32.totalorder %v1239, 1
      %v1241 = vsel %vm1240, %v737, 0.0
      %v1242 = vsel %vm1240, %v752, 0.0
      %v1243 = vsel %vm1240, %v744, 0.0
      %v1244 = vsel %vm1240, %v753, 0.0
      %v1245 = vsel %vm1240, %v751, 0.0
      %v1246 = vadd.f32 %v1234, %v1241
      %v1247 = vadd.f32 %v1235, %v1242
      %v1248 = vadd.f32 %v1236, %v1243
      %v1249 = vadd.f32 %v1237, %v1244
      %v1250 = vadd.f32 %v1238, %v1245
      %v1251 = vsel %vm1224, 1, 0
      %vm1252 = vcmp.eq.s32.totalorder %v1251, 1
      %v1253 = vsel %vm1252, %v777, 0.0
      %v1254 = vsel %vm1252, %v792, 0.0
      %v1255 = vsel %vm1252, %v784, 0.0
      %v1256 = vsel %vm1252, %v793, 0.0
      %v1257 = vsel %vm1252, %v791, 0.0
      %v1258 = vadd.f32 %v1246, %v1253
      %v1259 = vadd.f32 %v1247, %v1254
      %v1260 = vadd.f32 %v1248, %v1255
      %v1261 = vadd.f32 %v1249, %v1256
      %v1262 = vadd.f32 %v1250, %v1257
      %v1263 = vsel %vm1225, 1, 0
      %vm1264 = vcmp.eq.s32.totalorder %v1263, 1
      %v1265 = vsel %vm1264, %v817, 0.0
      %v1266 = vsel %vm1264, %v832, 0.0
      %v1267 = vsel %vm1264, %v824, 0.0
      %v1268 = vsel %vm1264, %v833, 0.0
      %v1269 = vsel %vm1264, %v831, 0.0
      %v1270 = vadd.f32 %v1258, %v1265
      %v1271 = vadd.f32 %v1259, %v1266
      %v1272 = vadd.f32 %v1260, %v1267
      %v1273 = vadd.f32 %v1261, %v1268
      %v1274 = vadd.f32 %v1262, %v1269
      %v1275 = vsel %vm1226, 1, 0
      %vm1276 = vcmp.eq.s32.totalorder %v1275, 1
      %v1277 = vsel %vm1276, %v857, 0.0
      %v1278 = vsel %vm1276, %v872, 0.0
      %v1279 = vsel %vm1276, %v864, 0.0
      %v1280 = vsel %vm1276, %v873, 0.0
      %v1281 = vsel %vm1276, %v871, 0.0
      %v1282 = vadd.f32 %v1270, %v1277
      %v1283 = vadd.f32 %v1271, %v1278
      %v1284 = vadd.f32 %v1272, %v1279
      %v1285 = vadd.f32 %v1273, %v1280
      %v1286 = vadd.f32 %v1274, %v1281
      %vm1287 = vcmp.ge.f32.partialorder %v1282, %v895
      %vm1288 = vcmp.ge.f32.partialorder %v1283, %v910
      %vm1289 = vcmp.ge.f32.partialorder %v1284, %v902
      %vm1290 = vcmp.ge.f32.partialorder %v1285, %v911
      %vm1291 = vcmp.ge.f32.partialorder %v1286, %v909
      %v1292 = vmax.f32 %v1172, %v1206
      %v1293 = vmax.f32 %v1173, %v1215
      %v1294 = vmax.f32 %v1174, %v1214
      %v1295 = vmax.f32 %v1175, %v1216
      %v1296 = vmax.f32 %v1176, %v1213
      %v1297 = vsel %vm1287, %v1292, %v1172
      %v1298 = vsel %vm1288, %v1293, %v1173
      %v1299 = vsel %vm1289, %v1294, %v1174
      %v1300 = vsel %vm1290, %v1295, %v1175
      %v1301 = vsel %vm1291, %v1296, %v1176
      %v1303 = vlaneseq
      %v1304 = vshrl.u32 %v1303, 7
      %v1305 = vsub.s32 0, %v1304
      %v1306 = vrot.slane %v616, %v1305
      %v1307 = vlaneseq
      %v1308 = vshrl.u32 %v1307, 7
      %v1309 = vsub.s32 2, %v1308
      %v1310 = vrot.slane %v616, %v1309
      %v1313 = vlaneseq
      %v1314 = vshrl.u32 %v1313, 7
      %v1315 = vsub.s32 0, %v1314
      %v1316 = vrot.slane %v1306, %v1315
      %v1317 = vlaneseq
      %v1318 = vshrl.u32 %v1317, 7
      %v1319 = vsub.s32 0, %v1318
      %v1320 = vrot.slane %v1310, %v1319
      %v1323 = vcombine.low %v1316, %v1320
      %v1324 = vcombine.high %v1316, %v1320
      %v1326 = vunpack.c.l.s4 1983009808
      %v1327 = vunpack.c.0.s8 %v1326
      %v1328 = vlaneseq
      %v1329 = vshrl.u32 %v1328, 7
      %v1330 = vsub.s32 %v1327, %v1329
      %v1331 = vrot.slane %v1323, %v1330
      %v1333 = vunpack.c.l.s4 1983009808
      %v1334 = vunpack.c.0.s8 %v1333
      %v1335 = vlaneseq
      %v1336 = vshrl.u32 %v1335, 7
      %v1337 = vsub.s32 %v1334, %v1336
      %v1338 = vrot.slane %v1324, %v1337
      %v1339 = vcombine.high %v1331, %v1331
      %v1340 = vrot.slane %v1331, 1
      %v1341 = vrot.slane %v1339, 1
      %vm1347 = vcmp.ge.f32.partialorder %v612, %v1331
      %vm1348 = vcmp.ge.f32.partialorder %v613, %v1340
      %vm1349 = vcmp.ge.f32.partialorder %v614, %v1339
      %vm1350 = vcmp.ge.f32.partialorder %v615, %v1341
      %vm1351 = vcmp.ge.f32.partialorder %v616, %v1338
      %v1352 = vsel %vm1347, 1, 0
      %vm1353 = vcmp.eq.s32.totalorder %v1352, 1
      %v1354 = vsel %vm1353, %v697, 0.0
      %v1355 = vsel %vm1353, %v712, 0.0
      %v1356 = vsel %vm1353, %v704, 0.0
      %v1357 = vsel %vm1353, %v713, 0.0
      %v1358 = vsel %vm1353, %v711, 0.0
      %v1359 = vadd.f32 %v1354, 0.0
      %v1360 = vadd.f32 %v1355, 0.0
      %v1361 = vadd.f32 %v1356, 0.0
      %v1362 = vadd.f32 %v1357, 0.0
      %v1363 = vadd.f32 %v1358, 0.0
      %v1364 = vsel %vm1348, 1, 0
      %vm1365 = vcmp.eq.s32.totalorder %v1364, 1
      %v1366 = vsel %vm1365, %v737, 0.0
      %v1367 = vsel %vm1365, %v752, 0.0
      %v1368 = vsel %vm1365, %v744, 0.0
      %v1369 = vsel %vm1365, %v753, 0.0
      %v1370 = vsel %vm1365, %v751, 0.0
      %v1371 = vadd.f32 %v1359, %v1366
      %v1372 = vadd.f32 %v1360, %v1367
      %v1373 = vadd.f32 %v1361, %v1368
      %v1374 = vadd.f32 %v1362, %v1369
      %v1375 = vadd.f32 %v1363, %v1370
      %v1376 = vsel %vm1349, 1, 0
      %vm1377 = vcmp.eq.s32.totalorder %v1376, 1
      %v1378 = vsel %vm1377, %v777, 0.0
      %v1379 = vsel %vm1377, %v792, 0.0
      %v1380 = vsel %vm1377, %v784, 0.0
      %v1381 = vsel %vm1377, %v793, 0.0
      %v1382 = vsel %vm1377, %v791, 0.0
      %v1383 = vadd.f32 %v1371, %v1378
      %v1384 = vadd.f32 %v1372, %v1379
      %v1385 = vadd.f32 %v1373, %v1380
      %v1386 = vadd.f32 %v1374, %v1381
      %v1387 = vadd.f32 %v1375, %v1382
      %v1388 = vsel %vm1350, 1, 0
      %vm1389 = vcmp.eq.s32.totalorder %v1388, 1
      %v1390 = vsel %vm1389, %v817, 0.0
      %v1391 = vsel %vm1389, %v832, 0.0
      %v1392 = vsel %vm1389, %v824, 0.0
      %v1393 = vsel %vm1389, %v833, 0.0
      %v1394 = vsel %vm1389, %v831, 0.0
      %v1395 = vadd.f32 %v1383, %v1390
      %v1396 = vadd.f32 %v1384, %v1391
      %v1397 = vadd.f32 %v1385, %v1392
      %v1398 = vadd.f32 %v1386, %v1393
      %v1399 = vadd.f32 %v1387, %v1394
      %v1400 = vsel %vm1351, 1, 0
      %vm1401 = vcmp.eq.s32.totalorder %v1400, 1
      %v1402 = vsel %vm1401, %v857, 0.0
      %v1403 = vsel %vm1401, %v872, 0.0
      %v1404 = vsel %vm1401, %v864, 0.0
      %v1405 = vsel %vm1401, %v873, 0.0
      %v1406 = vsel %vm1401, %v871, 0.0
      %v1407 = vadd.f32 %v1395, %v1402
      %v1408 = vadd.f32 %v1396, %v1403
      %v1409 = vadd.f32 %v1397, %v1404
      %v1410 = vadd.f32 %v1398, %v1405
      %v1411 = vadd.f32 %v1399, %v1406
      %vm1412 = vcmp.ge.f32.partialorder %v1407, %v895
      %vm1413 = vcmp.ge.f32.partialorder %v1408, %v910
      %vm1414 = vcmp.ge.f32.partialorder %v1409, %v902
      %vm1415 = vcmp.ge.f32.partialorder %v1410, %v911
      %vm1416 = vcmp.ge.f32.partialorder %v1411, %v909
      %v1417 = vmax.f32 %v1297, %v1331
      %v1418 = vmax.f32 %v1298, %v1340
      %v1419 = vmax.f32 %v1299, %v1339
      %v1420 = vmax.f32 %v1300, %v1341
      %v1421 = vmax.f32 %v1301, %v1338
      %v1422 = vsel %vm1412, %v1417, %v1297
      %v1423 = vsel %vm1413, %v1418, %v1298
      %v1424 = vsel %vm1414, %v1419, %v1299
      %v1425 = vsel %vm1415, %v1420, %v1300
      %v1426 = vsel %vm1416, %v1421, %v1301
      %v1427 = vld [vmem:[%s5] sm:$0x1]
      %v1428 = vld [vmem:[#allocation2] sm:$0x1]
      %1430 = vset.pattern.permute.xlu0 0
      %1431 = vperm.xlu0 %1430, %v1427
      %v1432 = vpop.permute.xlu0 %1431
      %v1434 = vlaneseq
      %v1435 = vshrl.u32 %v1434, 7
      %v1436 = vsub.s32 0, %v1435
      %v1437 = vrot.slane %v1432, %v1436
      %1438 = vset.pattern.permute.xlu0 1
      %1439 = vperm.xlu0 %1438, %v1427
      %v1440 = vpop.permute.xlu0 %1439
      %v1442 = vlaneseq
      %v1443 = vshrl.u32 %v1442, 7
      %v1444 = vsub.s32 0, %v1443
      %v1445 = vrot.slane %v1440, %v1444
      %1446 = vset.pattern.permute.xlu0 2
      %1447 = vperm.xlu0 %1446, %v1427
      %v1448 = vpop.permute.xlu0 %1447
      %v1450 = vlaneseq
      %v1451 = vshrl.u32 %v1450, 7
      %v1452 = vsub.s32 0, %v1451
      %v1453 = vrot.slane %v1448, %v1452
      %1454 = vset.pattern.permute.xlu0 3
      %1455 = vperm.xlu0 %1454, %v1427
      %v1456 = vpop.permute.xlu0 %1455
      %v1458 = vlaneseq
      %v1459 = vshrl.u32 %v1458, 7
      %v1460 = vsub.s32 0, %v1459
      %v1461 = vrot.slane %v1456, %v1460
      %1462 = vset.pattern.permute.xlu0 4
      %1463 = vperm.xlu0 %1462, %v1427
      %v1464 = vpop.permute.xlu0 %1463
      %v1466 = vlaneseq
      %v1467 = vshrl.u32 %v1466, 7
      %v1468 = vsub.s32 0, %v1467
      %v1469 = vrot.slane %v1464, %v1468
      %1471 = vset.pattern.permute.xlu0 0
      %1472 = vperm.xlu0 %1471, %v1428
      %v1473 = vpop.permute.xlu0 %1472
      %v1475 = vlaneseq
      %v1476 = vshrl.u32 %v1475, 7
      %v1477 = vsub.s32 0, %v1476
      %v1478 = vrot.slane %v1473, %v1477
      %v1480 = vlaneseq
      %v1481 = vshrl.u32 %v1480, 7
      %v1482 = vsub.s32 0, %v1481
      %v1483 = vrot.slane %v1422, %v1482
      %v1484 = vlaneseq
      %v1485 = vshrl.u32 %v1484, 7
      %v1486 = vsub.s32 2, %v1485
      %v1487 = vrot.slane %v1422, %v1486
      %v1490 = vlaneseq
      %v1491 = vshrl.u32 %v1490, 7
      %v1492 = vsub.s32 0, %v1491
      %v1493 = vrot.slane %v1483, %v1492
      %v1494 = vlaneseq
      %v1495 = vshrl.u32 %v1494, 7
      %v1496 = vsub.s32 0, %v1495
      %v1497 = vrot.slane %v1487, %v1496
      %v1500 = vcombine.low %v1493, %v1497
      %v1501 = vcombine.high %v1493, %v1497
      %v1503 = vunpack.c.l.s4 1983009808
      %v1504 = vunpack.c.0.s8 %v1503
      %v1505 = vlaneseq
      %v1506 = vshrl.u32 %v1505, 7
      %v1507 = vsub.s32 %v1504, %v1506
      %v1508 = vrot.slane %v1500, %v1507
      %v1510 = vunpack.c.l.s4 1983009808
      %v1511 = vunpack.c.0.s8 %v1510
      %v1512 = vlaneseq
      %v1513 = vshrl.u32 %v1512, 7
      %v1514 = vsub.s32 %v1511, %v1513
      %v1515 = vrot.slane %v1501, %v1514
      %v1516 = vcombine.high %v1508, %v1508
      %v1517 = vrot.slane %v1508, 1
      %v1518 = vrot.slane %v1516, 1
      %vm1524 = vcmp.ge.f32.partialorder %v1422, %v1508
      %vm1525 = vcmp.ge.f32.partialorder %v1423, %v1517
      %vm1526 = vcmp.ge.f32.partialorder %v1424, %v1516
      %vm1527 = vcmp.ge.f32.partialorder %v1425, %v1518
      %vm1528 = vcmp.ge.f32.partialorder %v1426, %v1515
      %v1529 = vsel %vm1524, %v1437, 0.0
      %v1530 = vadd.f32 %v1529, 0.0
      %v1531 = vsel %vm1525, %v1445, 0.0
      %v1532 = vadd.f32 %v1530, %v1531
      %v1533 = vsel %vm1526, %v1453, 0.0
      %v1534 = vadd.f32 %v1532, %v1533
      %v1535 = vsel %vm1527, %v1461, 0.0
      %v1536 = vadd.f32 %v1534, %v1535
      %v1537 = vsel %vm1528, %v1469, 0.0
      %v1538 = vadd.f32 %v1536, %v1537
      %vm1539 = vcmp.ge.f32.partialorder %v1538, %v1478
      %v1540 = vsel %vm1539, %v1422, -inf
      %v1542 = vlaneseq
      %v1543 = vshrl.u32 %v1542, 7
      %v1544 = vsub.s32 0, %v1543
      %v1545 = vrot.slane %v1423, %v1544
      %v1546 = vlaneseq
      %v1547 = vshrl.u32 %v1546, 7
      %v1548 = vsub.s32 2, %v1547
      %v1549 = vrot.slane %v1423, %v1548
      %v1552 = vlaneseq
      %v1553 = vshrl.u32 %v1552, 7
      %v1554 = vsub.s32 0, %v1553
      %v1555 = vrot.slane %v1545, %v1554
      %v1556 = vlaneseq
      %v1557 = vshrl.u32 %v1556, 7
      %v1558 = vsub.s32 0, %v1557
      %v1559 = vrot.slane %v1549, %v1558
      %v1562 = vcombine.low %v1555, %v1559
      %v1563 = vcombine.high %v1555, %v1559
      %v1565 = vunpack.c.l.s4 1983009808
      %v1566 = vunpack.c.0.s8 %v1565
      %v1567 = vlaneseq
      %v1568 = vshrl.u32 %v1567, 7
      %v1569 = vsub.s32 %v1566, %v1568
      %v1570 = vrot.slane %v1562, %v1569
      %v1572 = vunpack.c.l.s4 1983009808
      %v1573 = vunpack.c.0.s8 %v1572
      %v1574 = vlaneseq
      %v1575 = vshrl.u32 %v1574, 7
      %v1576 = vsub.s32 %v1573, %v1575
      %v1577 = vrot.slane %v1563, %v1576
      %v1578 = vcombine.high %v1570, %v1570
      %v1579 = vrot.slane %v1570, 1
      %v1580 = vrot.slane %v1578, 1
      %vm1586 = vcmp.ge.f32.partialorder %v1422, %v1570
      %vm1587 = vcmp.ge.f32.partialorder %v1423, %v1579
      %vm1588 = vcmp.ge.f32.partialorder %v1424, %v1578
      %vm1589 = vcmp.ge.f32.partialorder %v1425, %v1580
      %vm1590 = vcmp.ge.f32.partialorder %v1426, %v1577
      %v1591 = vsel %vm1586, %v1437, 0.0
      %v1592 = vadd.f32 %v1591, 0.0
      %v1593 = vsel %vm1587, %v1445, 0.0
      %v1594 = vadd.f32 %v1592, %v1593
      %v1595 = vsel %vm1588, %v1453, 0.0
      %v1596 = vadd.f32 %v1594, %v1595
      %v1597 = vsel %vm1589, %v1461, 0.0
      %v1598 = vadd.f32 %v1596, %v1597
      %v1599 = vsel %vm1590, %v1469, 0.0
      %v1600 = vadd.f32 %v1598, %v1599
      %vm1601 = vcmp.ge.f32.partialorder %v1600, %v1478
      %v1602 = vmax.f32 %v1540, %v1423
      %v1603 = vsel %vm1601, %v1602, %v1540
      %v1605 = vlaneseq
      %v1606 = vshrl.u32 %v1605, 7
      %v1607 = vsub.s32 0, %v1606
      %v1608 = vrot.slane %v1424, %v1607
      %v1609 = vlaneseq
      %v1610 = vshrl.u32 %v1609, 7
      %v1611 = vsub.s32 2, %v1610
      %v1612 = vrot.slane %v1424, %v1611
      %v1615 = vlaneseq
      %v1616 = vshrl.u32 %v1615, 7
      %v1617 = vsub.s32 0, %v1616
      %v1618 = vrot.slane %v1608, %v1617
      %v1619 = vlaneseq
      %v1620 = vshrl.u32 %v1619, 7
      %v1621 = vsub.s32 0, %v1620
      %v1622 = vrot.slane %v1612, %v1621
      %v1625 = vcombine.low %v1618, %v1622
      %v1626 = vcombine.high %v1618, %v1622
      %v1628 = vunpack.c.l.s4 1983009808
      %v1629 = vunpack.c.0.s8 %v1628
      %v1630 = vlaneseq
      %v1631 = vshrl.u32 %v1630, 7
      %v1632 = vsub.s32 %v1629, %v1631
      %v1633 = vrot.slane %v1625, %v1632
      %v1635 = vunpack.c.l.s4 1983009808
      %v1636 = vunpack.c.0.s8 %v1635
      %v1637 = vlaneseq
      %v1638 = vshrl.u32 %v1637, 7
      %v1639 = vsub.s32 %v1636, %v1638
      %v1640 = vrot.slane %v1626, %v1639
      %v1641 = vcombine.high %v1633, %v1633
      %v1642 = vrot.slane %v1633, 1
      %v1643 = vrot.slane %v1641, 1
      %vm1649 = vcmp.ge.f32.partialorder %v1422, %v1633
      %vm1650 = vcmp.ge.f32.partialorder %v1423, %v1642
      %vm1651 = vcmp.ge.f32.partialorder %v1424, %v1641
      %vm1652 = vcmp.ge.f32.partialorder %v1425, %v1643
      %vm1653 = vcmp.ge.f32.partialorder %v1426, %v1640
      %v1654 = vsel %vm1649, %v1437, 0.0
      %v1655 = vadd.f32 %v1654, 0.0
      %v1656 = vsel %vm1650, %v1445, 0.0
      %v1657 = vadd.f32 %v1655, %v1656
      %v1658 = vsel %vm1651, %v1453, 0.0
      %v1659 = vadd.f32 %v1657, %v1658
      %v1660 = vsel %vm1652, %v1461, 0.0
      %v1661 = vadd.f32 %v1659, %v1660
      %v1662 = vsel %vm1653, %v1469, 0.0
      %v1663 = vadd.f32 %v1661, %v1662
      %vm1664 = vcmp.ge.f32.partialorder %v1663, %v1478
      %v1665 = vmax.f32 %v1603, %v1424
      %v1666 = vsel %vm1664, %v1665, %v1603
      %v1668 = vlaneseq
      %v1669 = vshrl.u32 %v1668, 7
      %v1670 = vsub.s32 0, %v1669
      %v1671 = vrot.slane %v1425, %v1670
      %v1672 = vlaneseq
      %v1673 = vshrl.u32 %v1672, 7
      %v1674 = vsub.s32 2, %v1673
      %v1675 = vrot.slane %v1425, %v1674
      %v1678 = vlaneseq
      %v1679 = vshrl.u32 %v1678, 7
      %v1680 = vsub.s32 0, %v1679
      %v1681 = vrot.slane %v1671, %v1680
      %v1682 = vlaneseq
      %v1683 = vshrl.u32 %v1682, 7
      %v1684 = vsub.s32 0, %v1683
      %v1685 = vrot.slane %v1675, %v1684
      %v1688 = vcombine.low %v1681, %v1685
      %v1689 = vcombine.high %v1681, %v1685
      %v1691 = vunpack.c.l.s4 1983009808
      %v1692 = vunpack.c.0.s8 %v1691
      %v1693 = vlaneseq
      %v1694 = vshrl.u32 %v1693, 7
      %v1695 = vsub.s32 %v1692, %v1694
      %v1696 = vrot.slane %v1688, %v1695
      %v1698 = vunpack.c.l.s4 1983009808
      %v1699 = vunpack.c.0.s8 %v1698
      %v1700 = vlaneseq
      %v1701 = vshrl.u32 %v1700, 7
      %v1702 = vsub.s32 %v1699, %v1701
      %v1703 = vrot.slane %v1689, %v1702
      %v1704 = vcombine.high %v1696, %v1696
      %v1705 = vrot.slane %v1696, 1
      %v1706 = vrot.slane %v1704, 1
      %vm1712 = vcmp.ge.f32.partialorder %v1422, %v1696
      %vm1713 = vcmp.ge.f32.partialorder %v1423, %v1705
      %vm1714 = vcmp.ge.f32.partialorder %v1424, %v1704
      %vm1715 = vcmp.ge.f32.partialorder %v1425, %v1706
      %vm1716 = vcmp.ge.f32.partialorder %v1426, %v1703
      %v1717 = vsel %vm1712, %v1437, 0.0
      %v1718 = vadd.f32 %v1717, 0.0
      %v1719 = vsel %vm1713, %v1445, 0.0
      %v1720 = vadd.f32 %v1718, %v1719
      %v1721 = vsel %vm1714, %v1453, 0.0
      %v1722 = vadd.f32 %v1720, %v1721
      %v1723 = vsel %vm1715, %v1461, 0.0
      %v1724 = vadd.f32 %v1722, %v1723
      %v1725 = vsel %vm1716, %v1469, 0.0
      %v1726 = vadd.f32 %v1724, %v1725
      %vm1727 = vcmp.ge.f32.partialorder %v1726, %v1478
      %v1728 = vmax.f32 %v1666, %v1425
      %v1729 = vsel %vm1727, %v1728, %v1666
      %v1731 = vlaneseq
      %v1732 = vshrl.u32 %v1731, 7
      %v1733 = vsub.s32 0, %v1732
      %v1734 = vrot.slane %v1426, %v1733
      %v1735 = vlaneseq
      %v1736 = vshrl.u32 %v1735, 7
      %v1737 = vsub.s32 2, %v1736
      %v1738 = vrot.slane %v1426, %v1737
      %v1741 = vlaneseq
      %v1742 = vshrl.u32 %v1741, 7
      %v1743 = vsub.s32 0, %v1742
      %v1744 = vrot.slane %v1734, %v1743
      %v1745 = vlaneseq
      %v1746 = vshrl.u32 %v1745, 7
      %v1747 = vsub.s32 0, %v1746
      %v1748 = vrot.slane %v1738, %v1747
      %v1751 = vcombine.low %v1744, %v1748
      %v1752 = vcombine.high %v1744, %v1748
      %v1754 = vunpack.c.l.s4 1983009808
      %v1755 = vunpack.c.0.s8 %v1754
      %v1756 = vlaneseq
      %v1757 = vshrl.u32 %v1756, 7
      %v1758 = vsub.s32 %v1755, %v1757
      %v1759 = vrot.slane %v1751, %v1758
      %v1761 = vunpack.c.l.s4 1983009808
      %v1762 = vunpack.c.0.s8 %v1761
      %v1763 = vlaneseq
      %v1764 = vshrl.u32 %v1763, 7
      %v1765 = vsub.s32 %v1762, %v1764
      %v1766 = vrot.slane %v1752, %v1765
      %v1767 = vcombine.high %v1759, %v1759
      %v1768 = vrot.slane %v1759, 1
      %v1769 = vrot.slane %v1767, 1
      %vm1775 = vcmp.ge.f32.partialorder %v1422, %v1759
      %vm1776 = vcmp.ge.f32.partialorder %v1423, %v1768
      %vm1777 = vcmp.ge.f32.partialorder %v1424, %v1767
      %vm1778 = vcmp.ge.f32.partialorder %v1425, %v1769
      %vm1779 = vcmp.ge.f32.partialorder %v1426, %v1766
      %v1780 = vsel %vm1775, %v1437, 0.0
      %v1781 = vadd.f32 %v1780, 0.0
      %v1782 = vsel %vm1776, %v1445, 0.0
      %v1783 = vadd.f32 %v1781, %v1782
      %v1784 = vsel %vm1777, %v1453, 0.0
      %v1785 = vadd.f32 %v1783, %v1784
      %v1786 = vsel %vm1778, %v1461, 0.0
      %v1787 = vadd.f32 %v1785, %v1786
      %v1788 = vsel %vm1779, %v1469, 0.0
      %v1789 = vadd.f32 %v1787, %v1788
      %vm1790 = vcmp.ge.f32.partialorder %v1789, %v1478
      %v1791 = vmax.f32 %v1729, %v1426
      %v1792 = vsel %vm1790, %v1791, %v1729
      %v1795 = vunpack.c.l.s4 1966171168
      %v1796 = vunpack.c.0.s8 %v1795
      %v1797 = vlaneseq
      %v1798 = vshrl.u32 %v1797, 7
      %v1799 = vsub.s32 %v1796, %v1798
      %v1800 = vrot.slane %v1792, %v1799
      %v1802 = vlaneseq
      %vm1803 = vcmp.ge.s32.totalorder %v1802, 0
      %vm1804 = vcmp.lt.s32.totalorder %v1802, 256
      %vm1805 = vmand %vm1803, %vm1804
      %1806 = vst.msk [vmem:[%s316] sm:$0x3] %vm1805, %v1800
      %s1807 = smul.u32 2, %s25
      %p1808 = scmp.lt.s32.totalorder %s24, 1
      %s1809 = scalar_select %p1808, %s24, 1
      %p1810 = scmp.lt.s32.totalorder %s1807, 1
      %s1811 = scalar_select %p1810, %s1807, 1
      %s1812 = smul.addr %s1809, 2
      %s1813 = sadd.s32 %s1811, %s1812
      %s1814 = scalar_lea.vmem %s7, %s1813
      // Predicated region
      $region49: #{net_forward.1} parent=47 // pred_check
        %p1815 = pneg %p206
      $region50: #{net_forward.1} parent=47 // pred_check_branch
        %1817 = sbr.rel (%p1815) target = $region52
      $region51: #{net_forward.1} parent=47 // pred_region
        %s1818 = smul.u32 2, %s25
      $region52: #{net_forward.1} parent=47 // pred_fallthru
        _
    $region48: #{net_forward.1} parent=5 // pred_fallthru
      _
    %p1819 = scmp.le.s32.totalorder 2, %s15
    // Predicated region
    $region53: #{net_forward.1} parent=5 // pred_check
      %p1820 = pneg %p1819
    $region54: #{net_forward.1} parent=5 // pred_check_branch
      %1822 = sbr.rel (%p1820) target = $region56
    $region55: #{net_forward.1} parent=5 // pred_region
      %s1823 = ssub.s32 %s15, 2
      // Predicated region
      $region57: #{net_forward.1} parent=55 // pred_check
        %p1824 = pneg %p212
      $region58: #{net_forward.1} parent=55 // pred_check_branch
        %1826 = sbr.rel (%p1824) target = $region60
      $region59: #{net_forward.1} parent=55 // pred_region
        %s1827 = smul.u32 2, %s27
        %p1828 = scmp.lt.s32.totalorder %s26, 1
        %s1829 = scalar_select %p1828, %s26, 1
        %p1830 = scmp.lt.s32.totalorder %s1827, 1
        %s1831 = scalar_select %p1830, %s1827, 1
        %s1832 = smul.addr %s1829, 2
        %s1833 = sadd.s32 %s1831, %s1832
        %s1834 = scalar_lea.vmem %s7, %s1833
      $region60: #{net_forward.1} parent=55 // pred_fallthru
        _
    $region56: #{net_forward.1} parent=5 // pred_fallthru
      _
  $region6: #{net_forward.1} parent=0 // loop_footer
    %s19 = sadd.s32 1, %s15
  $region7: #{net_forward.1} parent=0 // loop_footer_branch
    %14 = sbr.rel target = $region3
  $region8: #{net_forward.1} parent=0 // loop_exit
    _

</llo_original>
